<compile_context>
chip_gen: v7x
topology: tpu7x:2x2x1
jax: 0.10.0
libtpu: 0.0.40
codegen_flags: <defaults>
</compile_context>

<pallas_src>
import functools

import jax
import jax.numpy as jnp
from jax.experimental import pallas as pl
from jax.experimental.pallas import tpu as pltpu


def _lstm_chunk_kernel(x_ref, wih_ref, whh_ref, bias_ref, out_ref,
                       gx_ref, h_ref, c_ref):
    """One grid step = T_CHUNK LSTM steps for one batch tile.

    x_ref   : (T_CHUNK, TB, I)  f32  raw inputs for this chunk
    wih_ref : (I, 4*Hp)         f32  resident W_ih^T (gate order [i,f,o,g], padded)
    whh_ref : (Hp, 4*Hp)        f32  resident W_hh^T
    bias_ref: (1, 4*Hp)         f32  b_ih + b_hh (padded lanes zero)
    out_ref : (T_CHUNK, TB, Hp) f32  hidden states for this chunk
    gx_ref  : (T_CHUNK, TB, 4*Hp) f32 scratch — per-chunk input projection
    h_ref/c_ref: (TB, Hp) f32 scratch, persist across time chunks.
    """
    t_chunk, tb, in_sz = x_ref.shape
    hp = whh_ref.shape[0]

    # New batch tile starts at time-chunk 0: reset the recurrent state.
    @pl.when(pl.program_id(1) == 0)
    def _():
        h_ref[...] = jnp.zeros_like(h_ref)
        c_ref[...] = jnp.zeros_like(c_ref)

    # ---- fused input projection for the whole chunk (off the serial path) ----
    # (TB is a multiple of 8, so merging the two leading dims is layout-trivial.)
    x2d = x_ref[...].reshape(t_chunk * tb, in_sz)
    gproj = jnp.dot(x2d, wih_ref[...],
                    preferred_element_type=jnp.float32) + bias_ref[...]
    gx_ref[...] = gproj.reshape(t_chunk, tb, 4 * hp)

    def step(s, carry):
        h, c = carry
        # Only the recurrent matmul is on the sequential critical path.
        gates = gx_ref[s] + jnp.dot(h, whh_ref[...],
                                    preferred_element_type=jnp.float32)
        # Gate layout [i, f, o, g]; all slices 128-lane aligned (hp % 128 == 0).
        # Sigmoid via tanh form: one EUP pass over the 3 sigmoid gates at once.
        sig = 0.5 * jnp.tanh(0.5 * gates[:, :3 * hp]) + 0.5
        i_g = sig[:, 0 * hp:1 * hp]
        f_g = sig[:, 1 * hp:2 * hp]
        o_g = sig[:, 2 * hp:3 * hp]
        g_g = jnp.tanh(gates[:, 3 * hp:4 * hp])
        c = f_g * c + i_g * g_g
        h = o_g * jnp.tanh(c)
        out_ref[s] = h.astype(out_ref.dtype)                 # lane-dense store
        return (h, c)

    # Partial unroll keeps LLO visibility without blowing the 64-vreg file.
    unroll = t_chunk if t_chunk <= 8 else 8
    h_fin, c_fin = jax.lax.fori_loop(0, t_chunk, step,
                                     (h_ref[...], c_ref[...]), unroll=unroll)
    h_ref[...] = h_fin
    c_ref[...] = c_fin


def lstm_encoder_forward(x, w_ih, w_hh, b_ih, b_hh, *, hidden_size,
                         embd_method="last"):
    """x: (B, T, I) float32 (batch_first). Weights follow PyTorch nn.LSTM:
       w_ih (4H, I), w_hh (4H, H), b_ih (4H,), b_hh (4H,), gate order [i,f,g,o]."""
    B, T, I = x.shape
    H = hidden_size
    Hp = ((H + 127) // 128) * 128          # lane-aligned per-gate width
    G = 4 * Hp
    pad_h = Hp - H
    # TODO(synk): for H <= 64 a packed-gate layout (pad 4H to one 128 multiple +
    # lane masks / pltpu.roll) would avoid the 128/H padding waste.

    # ---- gate reorder [i,f,g,o] -> [i,f,o,g] + gate-aware zero padding ----
    perm = jnp.array([0, 1, 3, 2], dtype=jnp.int32)
    w_ih4 = jnp.pad(w_ih.reshape(4, H, I)[perm], ((0, 0), (0, pad_h), (0, 0)))
    w_hh4 = jnp.pad(w_hh.reshape(4, H, H)[perm], ((0, 0), (0, pad_h), (0, pad_h)))
    bias4 = jnp.pad((b_ih + b_hh).reshape(4, H)[perm], ((0, 0), (0, pad_h)))

    wih_t = jnp.transpose(w_ih4.reshape(G, I)).astype(jnp.float32)    # (I, 4Hp)
    whh_t = jnp.transpose(w_hh4.reshape(G, Hp)).astype(jnp.float32)   # (Hp, 4Hp)
    bias = bias4.reshape(1, G).astype(jnp.float32)                    # (1, 4Hp)

    # ---- time-major layout + batch padding to a multiple of 8 ----
    T_CHUNK = min(T, 32)
    num_chunks = -(-T // T_CHUNK)
    T_pad = num_chunks * T_CHUNK
    B_pad = ((B + 7) // 8) * 8

    x_tm = jnp.transpose(x.astype(jnp.float32), (1, 0, 2))            # (T, B, I)
    x_tm = jnp.pad(x_tm, ((0, T_pad - T), (0, B_pad - B), (0, 0)))    # (T_pad, B_pad, I)

    # ---- batch tiling ("parallel" axis; >=2 tiles when possible for v7x) ----
    cap = min(B_pad, 128)
    if B_pad >= 16:
        cap = min(cap, B_pad // 2)
    TB = (cap // 8) * 8
    while B_pad % TB:
        TB -= 8
    num_b = B_pad // TB

    # ---- VMEM budget (double-buffered blocks + resident weights + scratch) ----
    est = (2 * (T_CHUNK * TB * I * 4)        # x blocks
           + 2 * (T_CHUNK * TB * Hp * 4)     # out blocks
           + 2 * ((I * G + Hp * G + G) * 4)  # resident weights + bias
           + T_CHUNK * TB * G * 4            # gx scratch
           + 2 * (TB * Hp * 4))              # h/c scratch
    vmem_limit = int(min(56 * 2**20, max(32 * 2**20, 2 * est)))

    out_tm = pl.pallas_call(
        _lstm_chunk_kernel,
        out_shape=jax.ShapeDtypeStruct((T_pad, B_pad, Hp), jnp.float32),
        grid_spec=pltpu.PrefetchScalarGridSpec(
            num_scalar_prefetch=0,
            grid=(num_b, num_chunks),
            in_specs=[
                pl.BlockSpec((T_CHUNK, TB, I), lambda b, c: (c, b, 0)),  # x chunk
                pl.BlockSpec((I, G), lambda b, c: (0, 0)),               # W_ih^T resident
                pl.BlockSpec((Hp, G), lambda b, c: (0, 0)),              # W_hh^T resident
                pl.BlockSpec((1, G), lambda b, c: (0, 0)),               # bias resident
            ],
            out_specs=pl.BlockSpec((T_CHUNK, TB, Hp), lambda b, c: (c, b, 0)),
            scratch_shapes=[
                pltpu.VMEM((T_CHUNK, TB, G), jnp.float32),   # gates_x for the chunk
                pltpu.VMEM((TB, Hp), jnp.float32),           # h_t
                pltpu.VMEM((TB, Hp), jnp.float32),           # c_t
            ],
        ),
        compiler_params=pltpu.CompilerParams(
            dimension_semantics=("parallel", "arbitrary"),
            vmem_limit_bytes=vmem_limit,
        ),
    )(x_tm, wih_t, whh_t, bias)

    # slice off time/batch/hidden padding BEFORE the layout transpose
    r_out = jnp.transpose(out_tm[:T, :B, :H], (1, 0, 2))               # (B, T, H)

    if embd_method == "last":
        return r_out
    if embd_method == "maxpool":
        pooled = jnp.max(r_out, axis=1, keepdims=True)
        return jnp.broadcast_to(pooled, r_out.shape)
    # TODO(synk): 'attention' / 'dense' heads (extra learned params) and
    # bidirectional=True are not wired up; module default path is 'last'.
    raise NotImplementedError(embd_method)


def _reference_lstm(x, w_ih, w_hh, b_ih, b_hh, hidden_size):
    """Pure-JAX f32 reference with PyTorch nn.LSTM gate order [i, f, g, o]."""
    B, T, I = x.shape
    H = hidden_size
    bias = b_ih + b_hh

    def step(carry, x_t):
        h, c = carry
        gates = x_t @ w_ih.T + h @ w_hh.T + bias
        i = jax.nn.sigmoid(gates[:, 0 * H:1 * H])
        f = jax.nn.sigmoid(gates[:, 1 * H:2 * H])
        g = jnp.tanh(gates[:, 2 * H:3 * H])
        o = jax.nn.sigmoid(gates[:, 3 * H:4 * H])
        c = f * c + i * g
        h = o * jnp.tanh(c)
        return (h, c), h

    init = (jnp.zeros((B, H), jnp.float32), jnp.zeros((B, H), jnp.float32))
    _, hs = jax.lax.scan(step, init, jnp.transpose(x, (1, 0, 2)))
    return jnp.transpose(hs, (1, 0, 2))


if __name__ == "__main__":
    B, T, I, H = 2, 8, 16, 32

    key = jax.random.PRNGKey(0)
    kx, k1, k2, k3, k4 = jax.random.split(key, 5)

    # nn.LSTM default init: U(-1/sqrt(H), 1/sqrt(H))
    bound = 1.0 / jnp.sqrt(jnp.float32(H))
    w_ih = jax.random.uniform(k1, (4 * H, I), jnp.float32, -bound, bound)
    w_hh = jax.random.uniform(k2, (4 * H, H), jnp.float32, -bound, bound)
    b_ih = jax.random.uniform(k3, (4 * H,), jnp.float32, -bound, bound)
    b_hh = jax.random.uniform(k4, (4 * H,), jnp.float32, -bound, bound)

    x = jax.random.normal(kx, (B, T, I), jnp.float32)

    out = lstm_encoder_forward(x, w_ih, w_hh, b_ih, b_hh, hidden_size=H,
                               embd_method="last")
    out = jax.block_until_ready(out)

    ref = _reference_lstm(x, w_ih, w_hh, b_ih, b_hh, H)
    assert out.shape == (B, T, H), out.shape
    assert jnp.allclose(out, ref, atol=2e-3, rtol=2e-3), \
        f"mismatch vs reference, max err {jnp.max(jnp.abs(out - ref))}"

    print("KERNEL_OK")
</pallas_src>

<mosaic_0001>
module attributes {stable_mosaic.version = 11 : i64} {
  func.func @_lstm_chunk_kernel(%arg0: i32, %arg1: i32, %arg2: memref<8x8x16xf32, #tpu.memory_space<vmem>>, %arg3: memref<16x512xf32, #tpu.memory_space<vmem>>, %arg4: memref<128x512xf32, #tpu.memory_space<vmem>>, %arg5: memref<1x512xf32, #tpu.memory_space<vmem>>, %arg6: memref<8x8x128xf32, #tpu.memory_space<vmem>>, %arg7: memref<8x8x512xf32, #tpu.memory_space<vmem>>, %arg8: memref<8x128xf32, #tpu.memory_space<vmem>>, %arg9: memref<8x128xf32, #tpu.memory_space<vmem>>) attributes {dimension_semantics = [#tpu.dimension_semantics<parallel>, #tpu.dimension_semantics<arbitrary>], iteration_bounds = array<i64: 1, 1>, scalar_prefetch = 0 : i64, scratch_operands = 3 : i64, tpu.core_type = #tpu.core_type<tc>, window_params = [{transform_indices = @transform_0, window_bounds = array<i64: 8, 8, 16>}, {pipeline_mode = #tpu.pipeline_mode<synchronous>, transform_indices = @transform_1, window_bounds = array<i64: 16, 512>}, {pipeline_mode = #tpu.pipeline_mode<synchronous>, transform_indices = @transform_2, window_bounds = array<i64: 128, 512>}, {pipeline_mode = #tpu.pipeline_mode<synchronous>, transform_indices = @transform_3, window_bounds = array<i64: 1, 512>}, {transform_indices = @transform_4, window_bounds = array<i64: 8, 8, 128>}]} {
    %c0_i32 = arith.constant 0 : i32
    %0 = arith.cmpi eq, %arg1, %c0_i32 : i32
    %1 = arith.extui %0 : i1 to i32
    %c0_i32_0 = arith.constant 0 : i32
    %2 = arith.cmpi ne, %1, %c0_i32_0 : i32
    scf.if %2 {
      %cst_99 = arith.constant 0.000000e+00 : f32
      %240 = vector.broadcast %cst_99 : f32 to vector<8x128xf32>
      %c0_100 = arith.constant 0 : index
      %c0_101 = arith.constant 0 : index
      %241 = vector.load %arg8[%c0_100, %c0_101] : memref<8x128xf32, #tpu.memory_space<vmem>>, vector<8x128xf32>
      tpu.vector_store %arg8[%c0_100, %c0_101], %240 {strides = array<i32>} : memref<8x128xf32, #tpu.memory_space<vmem>>, vector<8x128xf32>,
      %cst_102 = arith.constant 0.000000e+00 : f32
      %242 = vector.broadcast %cst_102 : f32 to vector<8x128xf32>
      %c0_103 = arith.constant 0 : index
      %c0_104 = arith.constant 0 : index
      %243 = vector.load %arg9[%c0_103, %c0_104] : memref<8x128xf32, #tpu.memory_space<vmem>>, vector<8x128xf32>
      tpu.vector_store %arg9[%c0_103, %c0_104], %242 {strides = array<i32>} : memref<8x128xf32, #tpu.memory_space<vmem>>, vector<8x128xf32>,
    } else {
    }
    %c0 = arith.constant 0 : index
    %c0_1 = arith.constant 0 : index
    %c0_2 = arith.constant 0 : index
    %3 = vector.load %arg2[%c0, %c0_1, %c0_2] : memref<8x8x16xf32, #tpu.memory_space<vmem>>, vector<8x8x16xf32>
    %4 = vector.shape_cast %3 : vector<8x8x16xf32> to vector<64x16xf32>
    %c0_3 = arith.constant 0 : index
    %c0_4 = arith.constant 0 : index
    %5 = vector.load %arg3[%c0_3, %c0_4] : memref<16x512xf32, #tpu.memory_space<vmem>>, vector<16x512xf32>
    %cst = arith.constant dense<0.000000e+00> : vector<64x512xf32>
    %6 = tpu.matmul %4, %5, %cst {dimension_numbers = #tpu.dot_dimension_numbers<[1], [0], [0], [1], [0, 0, 1, 1], [], []>} : vector<64x16xf32>, vector<16x512xf32>, vector<64x512xf32> -> vector<64x512xf32>
    %c0_5 = arith.constant 0 : index
    %c0_6 = arith.constant 0 : index
    %7 = vector.load %arg5[%c0_5, %c0_6] : memref<1x512xf32, #tpu.memory_space<vmem>>, vector<1x512xf32>
    %8 = vector.broadcast %7 : vector<1x512xf32> to vector<64x512xf32>
    %9 = arith.addf %6, %8 : vector<64x512xf32>
    %10 = vector.shape_cast %9 : vector<64x512xf32> to vector<8x8x512xf32>
    %c0_7 = arith.constant 0 : index
    %c0_8 = arith.constant 0 : index
    %c0_9 = arith.constant 0 : index
    %11 = vector.load %arg7[%c0_7, %c0_8, %c0_9] : memref<8x8x512xf32, #tpu.memory_space<vmem>>, vector<8x8x512xf32>
    tpu.vector_store %arg7[%c0_7, %c0_8, %c0_9], %10 {strides = array<i32>} : memref<8x8x512xf32, #tpu.memory_space<vmem>>, vector<8x8x512xf32>,
    %c0_10 = arith.constant 0 : index
    %c0_11 = arith.constant 0 : index
    %12 = vector.load %arg8[%c0_10, %c0_11] : memref<8x128xf32, #tpu.memory_space<vmem>>, vector<8x128xf32>
    %c0_12 = arith.constant 0 : index
    %c0_13 = arith.constant 0 : index
    %13 = vector.load %arg9[%c0_12, %c0_13] : memref<8x128xf32, #tpu.memory_space<vmem>>, vector<8x128xf32>
    %c0_i32_14 = arith.constant 0 : i32
    %14 = arith.index_cast %c0_i32_14 : i32 to index
    %c0_15 = arith.constant 0 : index
    %c0_16 = arith.constant 0 : index
    %15 = vector.load %arg7[%14, %c0_15, %c0_16] : memref<8x8x512xf32, #tpu.memory_space<vmem>>, vector<1x8x512xf32>
    %16 = vector.shape_cast %15 : vector<1x8x512xf32> to vector<8x512xf32>
    %c0_17 = arith.constant 0 : index
    %c0_18 = arith.constant 0 : index
    %17 = vector.load %arg4[%c0_17, %c0_18] : memref<128x512xf32, #tpu.memory_space<vmem>>, vector<128x512xf32>
    %cst_19 = arith.constant dense<0.000000e+00> : vector<8x512xf32>
    %18 = tpu.matmul %12, %17, %cst_19 {dimension_numbers = #tpu.dot_dimension_numbers<[1], [0], [0], [1], [0, 0, 1, 1], [], []>} : vector<8x128xf32>, vector<128x512xf32>, vector<8x512xf32> -> vector<8x512xf32>
    %19 = arith.addf %16, %18 : vector<8x512xf32>
    %20 = vector.extract_strided_slice %19 {offsets = [0, 0], sizes = [8, 384], strides = [1, 1]} : vector<8x512xf32> to vector<8x384xf32>
    %cst_20 = arith.constant 5.000000e-01 : f32
    %21 = vector.broadcast %cst_20 : f32 to vector<8x384xf32>
    %22 = arith.mulf %21, %20 : vector<8x384xf32>
    %23 = math.tanh %22 : vector<8x384xf32>
    %cst_21 = arith.constant 5.000000e-01 : f32
    %24 = vector.broadcast %cst_21 : f32 to vector<8x384xf32>
    %25 = arith.mulf %24, %23 : vector<8x384xf32>
    %cst_22 = arith.constant 5.000000e-01 : f32
    %26 = vector.broadcast %cst_22 : f32 to vector<8x384xf32>
    %27 = arith.addf %25, %26 : vector<8x384xf32>
    %28 = vector.extract_strided_slice %27 {offsets = [0, 0], sizes = [8, 128], strides = [1, 1]} : vector<8x384xf32> to vector<8x128xf32>
    %29 = vector.extract_strided_slice %27 {offsets = [0, 128], sizes = [8, 128], strides = [1, 1]} : vector<8x384xf32> to vector<8x128xf32>
    %30 = vector.extract_strided_slice %27 {offsets = [0, 256], sizes = [8, 128], strides = [1, 1]} : vector<8x384xf32> to vector<8x128xf32>
    %31 = vector.extract_strided_slice %19 {offsets = [0, 384], sizes = [8, 128], strides = [1, 1]} : vector<8x512xf32> to vector<8x128xf32>
    %32 = math.tanh %31 : vector<8x128xf32>
    %33 = arith.mulf %29, %13 : vector<8x128xf32>
    %34 = arith.mulf %28, %32 : vector<8x128xf32>
    %35 = arith.addf %33, %34 : vector<8x128xf32>
    %36 = math.tanh %35 : vector<8x128xf32>
    %37 = arith.mulf %30, %36 : vector<8x128xf32>
    %38 = arith.index_cast %c0_i32_14 : i32 to index
    %c0_23 = arith.constant 0 : index
    %c0_24 = arith.constant 0 : index
    %39 = vector.load %arg6[%38, %c0_23, %c0_24] : memref<8x8x128xf32, #tpu.memory_space<vmem>>, vector<1x8x128xf32>
    %40 = vector.shape_cast %39 : vector<1x8x128xf32> to vector<8x128xf32>
    %41 = vector.shape_cast %37 : vector<8x128xf32> to vector<1x8x128xf32>
    tpu.vector_store %arg6[%38, %c0_23, %c0_24], %41 {strides = array<i32>} : memref<8x8x128xf32, #tpu.memory_space<vmem>>, vector<1x8x128xf32>,
    %c1_i32 = arith.constant 1 : i32
    %42 = arith.index_cast %c1_i32 : i32 to index
    %c0_25 = arith.constant 0 : index
    %c0_26 = arith.constant 0 : index
    %43 = vector.load %arg7[%42, %c0_25, %c0_26] : memref<8x8x512xf32, #tpu.memory_space<vmem>>, vector<1x8x512xf32>
    %44 = vector.shape_cast %43 : vector<1x8x512xf32> to vector<8x512xf32>
    %c0_27 = arith.constant 0 : index
    %c0_28 = arith.constant 0 : index
    %45 = vector.load %arg4[%c0_27, %c0_28] : memref<128x512xf32, #tpu.memory_space<vmem>>, vector<128x512xf32>
    %cst_29 = arith.constant dense<0.000000e+00> : vector<8x512xf32>
    %46 = tpu.matmul %37, %45, %cst_29 {dimension_numbers = #tpu.dot_dimension_numbers<[1], [0], [0], [1], [0, 0, 1, 1], [], []>} : vector<8x128xf32>, vector<128x512xf32>, vector<8x512xf32> -> vector<8x512xf32>
    %47 = arith.addf %44, %46 : vector<8x512xf32>
    %48 = vector.extract_strided_slice %47 {offsets = [0, 0], sizes = [8, 384], strides = [1, 1]} : vector<8x512xf32> to vector<8x384xf32>
    %cst_30 = arith.constant 5.000000e-01 : f32
    %49 = vector.broadcast %cst_30 : f32 to vector<8x384xf32>
    %50 = arith.mulf %49, %48 : vector<8x384xf32>
    %51 = math.tanh %50 : vector<8x384xf32>
    %cst_31 = arith.constant 5.000000e-01 : f32
    %52 = vector.broadcast %cst_31 : f32 to vector<8x384xf32>
    %53 = arith.mulf %52, %51 : vector<8x384xf32>
    %cst_32 = arith.constant 5.000000e-01 : f32
    %54 = vector.broadcast %cst_32 : f32 to vector<8x384xf32>
    %55 = arith.addf %53, %54 : vector<8x384xf32>
    %56 = vector.extract_strided_slice %55 {offsets = [0, 0], sizes = [8, 128], strides = [1, 1]} : vector<8x384xf32> to vector<8x128xf32>
    %57 = vector.extract_strided_slice %55 {offsets = [0, 128], sizes = [8, 128], strides = [1, 1]} : vector<8x384xf32> to vector<8x128xf32>
    %58 = vector.extract_strided_slice %55 {offsets = [0, 256], sizes = [8, 128], strides = [1, 1]} : vector<8x384xf32> to vector<8x128xf32>
    %59 = vector.extract_strided_slice %47 {offsets = [0, 384], sizes = [8, 128], strides = [1, 1]} : vector<8x512xf32> to vector<8x128xf32>
    %60 = math.tanh %59 : vector<8x128xf32>
    %61 = arith.mulf %57, %35 : vector<8x128xf32>
    %62 = arith.mulf %56, %60 : vector<8x128xf32>
    %63 = arith.addf %61, %62 : vector<8x128xf32>
    %64 = math.tanh %63 : vector<8x128xf32>
    %65 = arith.mulf %58, %64 : vector<8x128xf32>
    %66 = arith.index_cast %c1_i32 : i32 to index
    %c0_33 = arith.constant 0 : index
    %c0_34 = arith.constant 0 : index
    %67 = vector.load %arg6[%66, %c0_33, %c0_34] : memref<8x8x128xf32, #tpu.memory_space<vmem>>, vector<1x8x128xf32>
    %68 = vector.shape_cast %67 : vector<1x8x128xf32> to vector<8x128xf32>
    %69 = vector.shape_cast %65 : vector<8x128xf32> to vector<1x8x128xf32>
    tpu.vector_store %arg6[%66, %c0_33, %c0_34], %69 {strides = array<i32>} : memref<8x8x128xf32, #tpu.memory_space<vmem>>, vector<1x8x128xf32>,
    %c2_i32 = arith.constant 2 : i32
    %70 = arith.index_cast %c2_i32 : i32 to index
    %c0_35 = arith.constant 0 : index
    %c0_36 = arith.constant 0 : index
    %71 = vector.load %arg7[%70, %c0_35, %c0_36] : memref<8x8x512xf32, #tpu.memory_space<vmem>>, vector<1x8x512xf32>
    %72 = vector.shape_cast %71 : vector<1x8x512xf32> to vector<8x512xf32>
    %c0_37 = arith.constant 0 : index
    %c0_38 = arith.constant 0 : index
    %73 = vector.load %arg4[%c0_37, %c0_38] : memref<128x512xf32, #tpu.memory_space<vmem>>, vector<128x512xf32>
    %cst_39 = arith.constant dense<0.000000e+00> : vector<8x512xf32>
    %74 = tpu.matmul %65, %73, %cst_39 {dimension_numbers = #tpu.dot_dimension_numbers<[1], [0], [0], [1], [0, 0, 1, 1], [], []>} : vector<8x128xf32>, vector<128x512xf32>, vector<8x512xf32> -> vector<8x512xf32>
    %75 = arith.addf %72, %74 : vector<8x512xf32>
    %76 = vector.extract_strided_slice %75 {offsets = [0, 0], sizes = [8, 384], strides = [1, 1]} : vector<8x512xf32> to vector<8x384xf32>
    %cst_40 = arith.constant 5.000000e-01 : f32
    %77 = vector.broadcast %cst_40 : f32 to vector<8x384xf32>
    %78 = arith.mulf %77, %76 : vector<8x384xf32>
    %79 = math.tanh %78 : vector<8x384xf32>
    %cst_41 = arith.constant 5.000000e-01 : f32
    %80 = vector.broadcast %cst_41 : f32 to vector<8x384xf32>
    %81 = arith.mulf %80, %79 : vector<8x384xf32>
    %cst_42 = arith.constant 5.000000e-01 : f32
    %82 = vector.broadcast %cst_42 : f32 to vector<8x384xf32>
    %83 = arith.addf %81, %82 : vector<8x384xf32>
    %84 = vector.extract_strided_slice %83 {offsets = [0, 0], sizes = [8, 128], strides = [1, 1]} : vector<8x384xf32> to vector<8x128xf32>
    %85 = vector.extract_strided_slice %83 {offsets = [0, 128], sizes = [8, 128], strides = [1, 1]} : vector<8x384xf32> to vector<8x128xf32>
    %86 = vector.extract_strided_slice %83 {offsets = [0, 256], sizes = [8, 128], strides = [1, 1]} : vector<8x384xf32> to vector<8x128xf32>
    %87 = vector.extract_strided_slice %75 {offsets = [0, 384], sizes = [8, 128], strides = [1, 1]} : vector<8x512xf32> to vector<8x128xf32>
    %88 = math.tanh %87 : vector<8x128xf32>
    %89 = arith.mulf %85, %63 : vector<8x128xf32>
    %90 = arith.mulf %84, %88 : vector<8x128xf32>
    %91 = arith.addf %89, %90 : vector<8x128xf32>
    %92 = math.tanh %91 : vector<8x128xf32>
    %93 = arith.mulf %86, %92 : vector<8x128xf32>
    %94 = arith.index_cast %c2_i32 : i32 to index
    %c0_43 = arith.constant 0 : index
    %c0_44 = arith.constant 0 : index
    %95 = vector.load %arg6[%94, %c0_43, %c0_44] : memref<8x8x128xf32, #tpu.memory_space<vmem>>, vector<1x8x128xf32>
    %96 = vector.shape_cast %95 : vector<1x8x128xf32> to vector<8x128xf32>
    %97 = vector.shape_cast %93 : vector<8x128xf32> to vector<1x8x128xf32>
    tpu.vector_store %arg6[%94, %c0_43, %c0_44], %97 {strides = array<i32>} : memref<8x8x128xf32, #tpu.memory_space<vmem>>, vector<1x8x128xf32>,
    %c3_i32 = arith.constant 3 : i32
    %98 = arith.index_cast %c3_i32 : i32 to index
    %c0_45 = arith.constant 0 : index
    %c0_46 = arith.constant 0 : index
    %99 = vector.load %arg7[%98, %c0_45, %c0_46] : memref<8x8x512xf32, #tpu.memory_space<vmem>>, vector<1x8x512xf32>
    %100 = vector.shape_cast %99 : vector<1x8x512xf32> to vector<8x512xf32>
    %c0_47 = arith.constant 0 : index
    %c0_48 = arith.constant 0 : index
    %101 = vector.load %arg4[%c0_47, %c0_48] : memref<128x512xf32, #tpu.memory_space<vmem>>, vector<128x512xf32>
    %cst_49 = arith.constant dense<0.000000e+00> : vector<8x512xf32>
    %102 = tpu.matmul %93, %101, %cst_49 {dimension_numbers = #tpu.dot_dimension_numbers<[1], [0], [0], [1], [0, 0, 1, 1], [], []>} : vector<8x128xf32>, vector<128x512xf32>, vector<8x512xf32> -> vector<8x512xf32>
    %103 = arith.addf %100, %102 : vector<8x512xf32>
    %104 = vector.extract_strided_slice %103 {offsets = [0, 0], sizes = [8, 384], strides = [1, 1]} : vector<8x512xf32> to vector<8x384xf32>
    %cst_50 = arith.constant 5.000000e-01 : f32
    %105 = vector.broadcast %cst_50 : f32 to vector<8x384xf32>
    %106 = arith.mulf %105, %104 : vector<8x384xf32>
    %107 = math.tanh %106 : vector<8x384xf32>
    %cst_51 = arith.constant 5.000000e-01 : f32
    %108 = vector.broadcast %cst_51 : f32 to vector<8x384xf32>
    %109 = arith.mulf %108, %107 : vector<8x384xf32>
    %cst_52 = arith.constant 5.000000e-01 : f32
    %110 = vector.broadcast %cst_52 : f32 to vector<8x384xf32>
    %111 = arith.addf %109, %110 : vector<8x384xf32>
    %112 = vector.extract_strided_slice %111 {offsets = [0, 0], sizes = [8, 128], strides = [1, 1]} : vector<8x384xf32> to vector<8x128xf32>
    %113 = vector.extract_strided_slice %111 {offsets = [0, 128], sizes = [8, 128], strides = [1, 1]} : vector<8x384xf32> to vector<8x128xf32>
    %114 = vector.extract_strided_slice %111 {offsets = [0, 256], sizes = [8, 128], strides = [1, 1]} : vector<8x384xf32> to vector<8x128xf32>
    %115 = vector.extract_strided_slice %103 {offsets = [0, 384], sizes = [8, 128], strides = [1, 1]} : vector<8x512xf32> to vector<8x128xf32>
    %116 = math.tanh %115 : vector<8x128xf32>
    %117 = arith.mulf %113, %91 : vector<8x128xf32>
    %118 = arith.mulf %112, %116 : vector<8x128xf32>
    %119 = arith.addf %117, %118 : vector<8x128xf32>
    %120 = math.tanh %119 : vector<8x128xf32>
    %121 = arith.mulf %114, %120 : vector<8x128xf32>
    %122 = arith.index_cast %c3_i32 : i32 to index
    %c0_53 = arith.constant 0 : index
    %c0_54 = arith.constant 0 : index
    %123 = vector.load %arg6[%122, %c0_53, %c0_54] : memref<8x8x128xf32, #tpu.memory_space<vmem>>, vector<1x8x128xf32>
    %124 = vector.shape_cast %123 : vector<1x8x128xf32> to vector<8x128xf32>
    %125 = vector.shape_cast %121 : vector<8x128xf32> to vector<1x8x128xf32>
    tpu.vector_store %arg6[%122, %c0_53, %c0_54], %125 {strides = array<i32>} : memref<8x8x128xf32, #tpu.memory_space<vmem>>, vector<1x8x128xf32>,
    %c4_i32 = arith.constant 4 : i32
    %126 = arith.index_cast %c4_i32 : i32 to index
    %c0_55 = arith.constant 0 : index
    %c0_56 = arith.constant 0 : index
    %127 = vector.load %arg7[%126, %c0_55, %c0_56] : memref<8x8x512xf32, #tpu.memory_space<vmem>>, vector<1x8x512xf32>
    %128 = vector.shape_cast %127 : vector<1x8x512xf32> to vector<8x512xf32>
    %c0_57 = arith.constant 0 : index
    %c0_58 = arith.constant 0 : index
    %129 = vector.load %arg4[%c0_57, %c0_58] : memref<128x512xf32, #tpu.memory_space<vmem>>, vector<128x512xf32>
    %cst_59 = arith.constant dense<0.000000e+00> : vector<8x512xf32>
    %130 = tpu.matmul %121, %129, %cst_59 {dimension_numbers = #tpu.dot_dimension_numbers<[1], [0], [0], [1], [0, 0, 1, 1], [], []>} : vector<8x128xf32>, vector<128x512xf32>, vector<8x512xf32> -> vector<8x512xf32>
    %131 = arith.addf %128, %130 : vector<8x512xf32>
    %132 = vector.extract_strided_slice %131 {offsets = [0, 0], sizes = [8, 384], strides = [1, 1]} : vector<8x512xf32> to vector<8x384xf32>
    %cst_60 = arith.constant 5.000000e-01 : f32
    %133 = vector.broadcast %cst_60 : f32 to vector<8x384xf32>
    %134 = arith.mulf %133, %132 : vector<8x384xf32>
    %135 = math.tanh %134 : vector<8x384xf32>
    %cst_61 = arith.constant 5.000000e-01 : f32
    %136 = vector.broadcast %cst_61 : f32 to vector<8x384xf32>
    %137 = arith.mulf %136, %135 : vector<8x384xf32>
    %cst_62 = arith.constant 5.000000e-01 : f32
    %138 = vector.broadcast %cst_62 : f32 to vector<8x384xf32>
    %139 = arith.addf %137, %138 : vector<8x384xf32>
    %140 = vector.extract_strided_slice %139 {offsets = [0, 0], sizes = [8, 128], strides = [1, 1]} : vector<8x384xf32> to vector<8x128xf32>
    %141 = vector.extract_strided_slice %139 {offsets = [0, 128], sizes = [8, 128], strides = [1, 1]} : vector<8x384xf32> to vector<8x128xf32>
    %142 = vector.extract_strided_slice %139 {offsets = [0, 256], sizes = [8, 128], strides = [1, 1]} : vector<8x384xf32> to vector<8x128xf32>
    %143 = vector.extract_strided_slice %131 {offsets = [0, 384], sizes = [8, 128], strides = [1, 1]} : vector<8x512xf32> to vector<8x128xf32>
    %144 = math.tanh %143 : vector<8x128xf32>
    %145 = arith.mulf %141, %119 : vector<8x128xf32>
    %146 = arith.mulf %140, %144 : vector<8x128xf32>
    %147 = arith.addf %145, %146 : vector<8x128xf32>
    %148 = math.tanh %147 : vector<8x128xf32>
    %149 = arith.mulf %142, %148 : vector<8x128xf32>
    %150 = arith.index_cast %c4_i32 : i32 to index
    %c0_63 = arith.constant 0 : index
    %c0_64 = arith.constant 0 : index
    %151 = vector.load %arg6[%150, %c0_63, %c0_64] : memref<8x8x128xf32, #tpu.memory_space<vmem>>, vector<1x8x128xf32>
    %152 = vector.shape_cast %151 : vector<1x8x128xf32> to vector<8x128xf32>
    %153 = vector.shape_cast %149 : vector<8x128xf32> to vector<1x8x128xf32>
    tpu.vector_store %arg6[%150, %c0_63, %c0_64], %153 {strides = array<i32>} : memref<8x8x128xf32, #tpu.memory_space<vmem>>, vector<1x8x128xf32>,
    %c5_i32 = arith.constant 5 : i32
    %154 = arith.index_cast %c5_i32 : i32 to index
    %c0_65 = arith.constant 0 : index
    %c0_66 = arith.constant 0 : index
    %155 = vector.load %arg7[%154, %c0_65, %c0_66] : memref<8x8x512xf32, #tpu.memory_space<vmem>>, vector<1x8x512xf32>
    %156 = vector.shape_cast %155 : vector<1x8x512xf32> to vector<8x512xf32>
    %c0_67 = arith.constant 0 : index
    %c0_68 = arith.constant 0 : index
    %157 = vector.load %arg4[%c0_67, %c0_68] : memref<128x512xf32, #tpu.memory_space<vmem>>, vector<128x512xf32>
    %cst_69 = arith.constant dense<0.000000e+00> : vector<8x512xf32>
    %158 = tpu.matmul %149, %157, %cst_69 {dimension_numbers = #tpu.dot_dimension_numbers<[1], [0], [0], [1], [0, 0, 1, 1], [], []>} : vector<8x128xf32>, vector<128x512xf32>, vector<8x512xf32> -> vector<8x512xf32>
    %159 = arith.addf %156, %158 : vector<8x512xf32>
    %160 = vector.extract_strided_slice %159 {offsets = [0, 0], sizes = [8, 384], strides = [1, 1]} : vector<8x512xf32> to vector<8x384xf32>
    %cst_70 = arith.constant 5.000000e-01 : f32
    %161 = vector.broadcast %cst_70 : f32 to vector<8x384xf32>
    %162 = arith.mulf %161, %160 : vector<8x384xf32>
    %163 = math.tanh %162 : vector<8x384xf32>
    %cst_71 = arith.constant 5.000000e-01 : f32
    %164 = vector.broadcast %cst_71 : f32 to vector<8x384xf32>
    %165 = arith.mulf %164, %163 : vector<8x384xf32>
    %cst_72 = arith.constant 5.000000e-01 : f32
    %166 = vector.broadcast %cst_72 : f32 to vector<8x384xf32>
    %167 = arith.addf %165, %166 : vector<8x384xf32>
    %168 = vector.extract_strided_slice %167 {offsets = [0, 0], sizes = [8, 128], strides = [1, 1]} : vector<8x384xf32> to vector<8x128xf32>
    %169 = vector.extract_strided_slice %167 {offsets = [0, 128], sizes = [8, 128], strides = [1, 1]} : vector<8x384xf32> to vector<8x128xf32>
    %170 = vector.extract_strided_slice %167 {offsets = [0, 256], sizes = [8, 128], strides = [1, 1]} : vector<8x384xf32> to vector<8x128xf32>
    %171 = vector.extract_strided_slice %159 {offsets = [0, 384], sizes = [8, 128], strides = [1, 1]} : vector<8x512xf32> to vector<8x128xf32>
    %172 = math.tanh %171 : vector<8x128xf32>
    %173 = arith.mulf %169, %147 : vector<8x128xf32>
    %174 = arith.mulf %168, %172 : vector<8x128xf32>
    %175 = arith.addf %173, %174 : vector<8x128xf32>
    %176 = math.tanh %175 : vector<8x128xf32>
    %177 = arith.mulf %170, %176 : vector<8x128xf32>
    %178 = arith.index_cast %c5_i32 : i32 to index
    %c0_73 = arith.constant 0 : index
    %c0_74 = arith.constant 0 : index
    %179 = vector.load %arg6[%178, %c0_73, %c0_74] : memref<8x8x128xf32, #tpu.memory_space<vmem>>, vector<1x8x128xf32>
    %180 = vector.shape_cast %179 : vector<1x8x128xf32> to vector<8x128xf32>
    %181 = vector.shape_cast %177 : vector<8x128xf32> to vector<1x8x128xf32>
    tpu.vector_store %arg6[%178, %c0_73, %c0_74], %181 {strides = array<i32>} : memref<8x8x128xf32, #tpu.memory_space<vmem>>, vector<1x8x128xf32>,
    %c6_i32 = arith.constant 6 : i32
    %182 = arith.index_cast %c6_i32 : i32 to index
    %c0_75 = arith.constant 0 : index
    %c0_76 = arith.constant 0 : index
    %183 = vector.load %arg7[%182, %c0_75, %c0_76] : memref<8x8x512xf32, #tpu.memory_space<vmem>>, vector<1x8x512xf32>
    %184 = vector.shape_cast %183 : vector<1x8x512xf32> to vector<8x512xf32>
    %c0_77 = arith.constant 0 : index
    %c0_78 = arith.constant 0 : index
    %185 = vector.load %arg4[%c0_77, %c0_78] : memref<128x512xf32, #tpu.memory_space<vmem>>, vector<128x512xf32>
    %cst_79 = arith.constant dense<0.000000e+00> : vector<8x512xf32>
    %186 = tpu.matmul %177, %185, %cst_79 {dimension_numbers = #tpu.dot_dimension_numbers<[1], [0], [0], [1], [0, 0, 1, 1], [], []>} : vector<8x128xf32>, vector<128x512xf32>, vector<8x512xf32> -> vector<8x512xf32>
    %187 = arith.addf %184, %186 : vector<8x512xf32>
    %188 = vector.extract_strided_slice %187 {offsets = [0, 0], sizes = [8, 384], strides = [1, 1]} : vector<8x512xf32> to vector<8x384xf32>
    %cst_80 = arith.constant 5.000000e-01 : f32
    %189 = vector.broadcast %cst_80 : f32 to vector<8x384xf32>
    %190 = arith.mulf %189, %188 : vector<8x384xf32>
    %191 = math.tanh %190 : vector<8x384xf32>
    %cst_81 = arith.constant 5.000000e-01 : f32
    %192 = vector.broadcast %cst_81 : f32 to vector<8x384xf32>
    %193 = arith.mulf %192, %191 : vector<8x384xf32>
    %cst_82 = arith.constant 5.000000e-01 : f32
    %194 = vector.broadcast %cst_82 : f32 to vector<8x384xf32>
    %195 = arith.addf %193, %194 : vector<8x384xf32>
    %196 = vector.extract_strided_slice %195 {offsets = [0, 0], sizes = [8, 128], strides = [1, 1]} : vector<8x384xf32> to vector<8x128xf32>
    %197 = vector.extract_strided_slice %195 {offsets = [0, 128], sizes = [8, 128], strides = [1, 1]} : vector<8x384xf32> to vector<8x128xf32>
    %198 = vector.extract_strided_slice %195 {offsets = [0, 256], sizes = [8, 128], strides = [1, 1]} : vector<8x384xf32> to vector<8x128xf32>
    %199 = vector.extract_strided_slice %187 {offsets = [0, 384], sizes = [8, 128], strides = [1, 1]} : vector<8x512xf32> to vector<8x128xf32>
    %200 = math.tanh %199 : vector<8x128xf32>
    %201 = arith.mulf %197, %175 : vector<8x128xf32>
    %202 = arith.mulf %196, %200 : vector<8x128xf32>
    %203 = arith.addf %201, %202 : vector<8x128xf32>
    %204 = math.tanh %203 : vector<8x128xf32>
    %205 = arith.mulf %198, %204 : vector<8x128xf32>
    %206 = arith.index_cast %c6_i32 : i32 to index
    %c0_83 = arith.constant 0 : index
    %c0_84 = arith.constant 0 : index
    %207 = vector.load %arg6[%206, %c0_83, %c0_84] : memref<8x8x128xf32, #tpu.memory_space<vmem>>, vector<1x8x128xf32>
    %208 = vector.shape_cast %207 : vector<1x8x128xf32> to vector<8x128xf32>
    %209 = vector.shape_cast %205 : vector<8x128xf32> to vector<1x8x128xf32>
    tpu.vector_store %arg6[%206, %c0_83, %c0_84], %209 {strides = array<i32>} : memref<8x8x128xf32, #tpu.memory_space<vmem>>, vector<1x8x128xf32>,
    %c7_i32 = arith.constant 7 : i32
    %210 = arith.index_cast %c7_i32 : i32 to index
    %c0_85 = arith.constant 0 : index
    %c0_86 = arith.constant 0 : index
    %211 = vector.load %arg7[%210, %c0_85, %c0_86] : memref<8x8x512xf32, #tpu.memory_space<vmem>>, vector<1x8x512xf32>
    %212 = vector.shape_cast %211 : vector<1x8x512xf32> to vector<8x512xf32>
    %c0_87 = arith.constant 0 : index
    %c0_88 = arith.constant 0 : index
    %213 = vector.load %arg4[%c0_87, %c0_88] : memref<128x512xf32, #tpu.memory_space<vmem>>, vector<128x512xf32>
    %cst_89 = arith.constant dense<0.000000e+00> : vector<8x512xf32>
    %214 = tpu.matmul %205, %213, %cst_89 {dimension_numbers = #tpu.dot_dimension_numbers<[1], [0], [0], [1], [0, 0, 1, 1], [], []>} : vector<8x128xf32>, vector<128x512xf32>, vector<8x512xf32> -> vector<8x512xf32>
    %215 = arith.addf %212, %214 : vector<8x512xf32>
    %216 = vector.extract_strided_slice %215 {offsets = [0, 0], sizes = [8, 384], strides = [1, 1]} : vector<8x512xf32> to vector<8x384xf32>
    %cst_90 = arith.constant 5.000000e-01 : f32
    %217 = vector.broadcast %cst_90 : f32 to vector<8x384xf32>
    %218 = arith.mulf %217, %216 : vector<8x384xf32>
    %219 = math.tanh %218 : vector<8x384xf32>
    %cst_91 = arith.constant 5.000000e-01 : f32
    %220 = vector.broadcast %cst_91 : f32 to vector<8x384xf32>
    %221 = arith.mulf %220, %219 : vector<8x384xf32>
    %cst_92 = arith.constant 5.000000e-01 : f32
    %222 = vector.broadcast %cst_92 : f32 to vector<8x384xf32>
    %223 = arith.addf %221, %222 : vector<8x384xf32>
    %224 = vector.extract_strided_slice %223 {offsets = [0, 0], sizes = [8, 128], strides = [1, 1]} : vector<8x384xf32> to vector<8x128xf32>
    %225 = vector.extract_strided_slice %223 {offsets = [0, 128], sizes = [8, 128], strides = [1, 1]} : vector<8x384xf32> to vector<8x128xf32>
    %226 = vector.extract_strided_slice %223 {offsets = [0, 256], sizes = [8, 128], strides = [1, 1]} : vector<8x384xf32> to vector<8x128xf32>
    %227 = vector.extract_strided_slice %215 {offsets = [0, 384], sizes = [8, 128], strides = [1, 1]} : vector<8x512xf32> to vector<8x128xf32>
    %228 = math.tanh %227 : vector<8x128xf32>
    %229 = arith.mulf %225, %203 : vector<8x128xf32>
    %230 = arith.mulf %224, %228 : vector<8x128xf32>
    %231 = arith.addf %229, %230 : vector<8x128xf32>
    %232 = math.tanh %231 : vector<8x128xf32>
    %233 = arith.mulf %226, %232 : vector<8x128xf32>
    %234 = arith.index_cast %c7_i32 : i32 to index
    %c0_93 = arith.constant 0 : index
    %c0_94 = arith.constant 0 : index
    %235 = vector.load %arg6[%234, %c0_93, %c0_94] : memref<8x8x128xf32, #tpu.memory_space<vmem>>, vector<1x8x128xf32>
    %236 = vector.shape_cast %235 : vector<1x8x128xf32> to vector<8x128xf32>
    %237 = vector.shape_cast %233 : vector<8x128xf32> to vector<1x8x128xf32>
    tpu.vector_store %arg6[%234, %c0_93, %c0_94], %237 {strides = array<i32>} : memref<8x8x128xf32, #tpu.memory_space<vmem>>, vector<1x8x128xf32>,
    %c8_i32 = arith.constant 8 : i32
    %c0_95 = arith.constant 0 : index
    %c0_96 = arith.constant 0 : index
    %238 = vector.load %arg8[%c0_95, %c0_96] : memref<8x128xf32, #tpu.memory_space<vmem>>, vector<8x128xf32>
    tpu.vector_store %arg8[%c0_95, %c0_96], %233 {strides = array<i32>} : memref<8x128xf32, #tpu.memory_space<vmem>>, vector<8x128xf32>,
    %c0_97 = arith.constant 0 : index
    %c0_98 = arith.constant 0 : index
    %239 = vector.load %arg9[%c0_97, %c0_98] : memref<8x128xf32, #tpu.memory_space<vmem>>, vector<8x128xf32>
    tpu.vector_store %arg9[%c0_97, %c0_98], %231 {strides = array<i32>} : memref<8x128xf32, #tpu.memory_space<vmem>>, vector<8x128xf32>,
    return
  }
  func.func @transform_0(%arg0: i32, %arg1: i32) -> (i32, i32, i32) {
    %c0_i32 = arith.constant 0 : i32
    %c0_i32_0 = arith.constant 0 : i32
    return %arg1, %arg0, %c0_i32 : i32, i32, i32
  }
  func.func @transform_1(%arg0: i32, %arg1: i32) -> (i32, i32) {
    %c0_i32 = arith.constant 0 : i32
    %c0_i32_0 = arith.constant 0 : i32
    %c0_i32_1 = arith.constant 0 : i32
    return %c0_i32, %c0_i32_0 : i32, i32
  }
  func.func @transform_2(%arg0: i32, %arg1: i32) -> (i32, i32) {
    %c0_i32 = arith.constant 0 : i32
    %c0_i32_0 = arith.constant 0 : i32
    %c0_i32_1 = arith.constant 0 : i32
    return %c0_i32, %c0_i32_0 : i32, i32
  }
  func.func @transform_3(%arg0: i32, %arg1: i32) -> (i32, i32) {
    %c0_i32 = arith.constant 0 : i32
    %c0_i32_0 = arith.constant 0 : i32
    %c0_i32_1 = arith.constant 0 : i32
    return %c0_i32, %c0_i32_0 : i32, i32
  }
  func.func @transform_4(%arg0: i32, %arg1: i32) -> (i32, i32, i32) {
    %c0_i32 = arith.constant 0 : i32
    %c0_i32_0 = arith.constant 0 : i32
    return %arg1, %arg0, %c0_i32 : i32, i32, i32
  }
}

</mosaic_0001>

<llo_original>
// kernel: tpu_custom_call.1
$region0: #{tpu_custom_call.1}
  #allocation0 [shape = 'u32[]', space=smem, size = 0x4, offset = 0x4, fixed_abs, tag = 'smem constant byte address 0x4 - core index']
  #allocation1 [shape = 'u32[144,128]{1,0:T(1,128)}', space=vmem, size = 0x12000, scoped, tag = 'internal scratch']
  #allocation2 [shape = 'f32[8,8,512]{2,1,0:T(8,128)}', space=vmem, size = 0x20000, scoped, tag = 'scratch operand']
  #allocation3 [shape = 'f32[8,128]{1,0:T(8,128)}', space=vmem, size = 0x1000, scoped, tag = 'scratch operand']
  #allocation4 [shape = 'f32[8,128]{1,0:T(8,128)}', space=vmem, size = 0x1000, scoped, tag = 'scratch operand']
  %s0 = inlined_call_operand.hbm [shape: f32[8,8,16], index: 0, kind: input, shape index: {}]
  %s1 = inlined_call_operand.hbm [shape: f32[16,512], index: 1, kind: input, shape index: {}]
  %s2 = inlined_call_operand.hbm [shape: f32[128,512], index: 2, kind: input, shape index: {}]
  %s3 = inlined_call_operand.vmem [shape: f32[1,512], index: 3, kind: input, shape index: {}]
  %s4 = inlined_call_operand.hbm [shape: f32[8,8,128], index: 4, kind: output, shape index: {}]
  %s5 = sld [smem:[#allocation0]]
  $region42: #{tpu_custom_call.1} parent=0
    _
  %s7 = ssub.s32 1, %s5
  %s8 = scalar_select 0, %s7, %s5
  $region1: #{tpu_custom_call.1} parent=0
    #allocation5 [shape = 'u8[32768]{0}', space=vmem, size = 0x8000, scoped, tag = 'input window, operand 0, single buffered']
    #allocation6 [shape = 's32[1]{0}', space=sflag, size = 0x4, scoped, tag = 'scoped memory for tpu_custom_call.1']
    #allocation7 [shape = 's32[1]{0}', space=sflag, size = 0x4, scoped, tag = 'scoped memory for tpu_custom_call.1']
    #allocation8 [shape = 'u8[32768]{0}', space=vmem, size = 0x8000, scoped, tag = 'input window, operand 1, single buffered']
    #allocation9 [shape = 's32[1]{0}', space=sflag, size = 0x4, scoped, tag = 'scoped memory for tpu_custom_call.1']
    #allocation10 [shape = 'u8[262144]{0}', space=vmem, size = 0x40000, scoped, tag = 'input window, operand 2, single buffered']
    #allocation11 [shape = 'u8[32768]{0}', space=vmem, size = 0x8000, scoped, tag = 'output window, operand 0, single buffered']
    %9 = vsyncpa [#allocation6], 0
    %10 = vsyncpa [#allocation9], 0
    %11 = vsyncpa [#allocation7], 0
    // Predicated region
    $region2: #{tpu_custom_call.1} parent=1 // pred_check
      _
    $region3: #{tpu_custom_call.1} parent=1 // pred_check_branch
      %13 = sbr.rel (0) target = $region5
    $region4: #{tpu_custom_call.1} parent=1 // pred_region
      %s15 = ssub.s32 1024, 1024
      %16 = vsyncadd [#allocation6], %s15
      %s17 = sshll.u32 [#allocation5], 4
      %s18 = int_to_ptr.vmem [resolvable:$true] %s17
      %23 = dma.hbm_to_vmem [thread:$0]  %s0, 1024, %s18, [#allocation6], 128, 128, 8
    $region5: #{tpu_custom_call.1} parent=1 // pred_fallthru
      _
    // Predicated region
    $region6: #{tpu_custom_call.1} parent=1 // pred_check
      _
    $region7: #{tpu_custom_call.1} parent=1 // pred_check_branch
      %25 = sbr.rel (0) target = $region9
    $region8: #{tpu_custom_call.1} parent=1 // pred_region
      %s27 = ssub.s32 1024, 1024
      %28 = vsyncadd [#allocation9], %s27
      %s29 = sshll.u32 [#allocation8], 4
      %s30 = int_to_ptr.vmem [resolvable:$true] %s29
      %35 = dma.hbm_to_vmem [thread:$0]  %s1, 1024, %s30, [#allocation9], 512, 512, 32
    $region9: #{tpu_custom_call.1} parent=1 // pred_fallthru
      _
    // Predicated region
    $region10: #{tpu_custom_call.1} parent=1 // pred_check
      _
    $region11: #{tpu_custom_call.1} parent=1 // pred_check_branch
      %37 = sbr.rel (0) target = $region13
    $region12: #{tpu_custom_call.1} parent=1 // pred_region
      %s39 = ssub.s32 8192, 8192
      %40 = vsyncadd [#allocation9], %s39
      %s41 = sshll.u32 [#allocation10], 4
      %s42 = int_to_ptr.vmem [resolvable:$true] %s41
      %47 = dma.hbm_to_vmem [thread:$0]  %s2, 8192, %s42, [#allocation9], 512, 512, 32
    $region13: #{tpu_custom_call.1} parent=1 // pred_fallthru
      _
    // Predicated region
    $region14: #{tpu_custom_call.1} parent=1 // pred_check
      _
    $region15: #{tpu_custom_call.1} parent=1 // pred_check_branch
      %49 = sbr.rel (0) target = $region17
    $region16: #{tpu_custom_call.1} parent=1 // pred_region
      _
    $region17: #{tpu_custom_call.1} parent=1 // pred_fallthru
      _
    // Predicated region
    $region18: #{tpu_custom_call.1} parent=1 // pred_check
      _
    $region19: #{tpu_custom_call.1} parent=1 // pred_check_branch
      %51 = sbr.rel (0) target = $region21
    $region20: #{tpu_custom_call.1} parent=1 // pred_region
      %52 = dma.done [#allocation6], 1024
    $region21: #{tpu_custom_call.1} parent=1 // pred_fallthru
      _
    // Predicated region
    $region22: #{tpu_custom_call.1} parent=1 // pred_check
      _
    $region23: #{tpu_custom_call.1} parent=1 // pred_check_branch
      %54 = sbr.rel (0) target = $region25
    $region24: #{tpu_custom_call.1} parent=1 // pred_region
      %55 = dma.done [#allocation9], 1024
    $region25: #{tpu_custom_call.1} parent=1 // pred_fallthru
      _
    // Predicated region
    $region26: #{tpu_custom_call.1} parent=1 // pred_check
      _
    $region27: #{tpu_custom_call.1} parent=1 // pred_check_branch
      %57 = sbr.rel (0) target = $region29
    $region28: #{tpu_custom_call.1} parent=1 // pred_region
      %58 = dma.done [#allocation9], 8192
    $region29: #{tpu_custom_call.1} parent=1 // pred_fallthru
      _
    %p59 = scmp.eq.s32.totalorder 0, 0
    // Predicated region
    $region30: #{tpu_custom_call.1} parent=1 // pred_check
      %p60 = pneg %p59
    $region31: #{tpu_custom_call.1} parent=1 // pred_check_branch
      %62 = sbr.rel (%p60) target = $region33
    $region32: #{tpu_custom_call.1} parent=1 // pred_region
      %63 = vst [vmem:[#allocation3] sm:$0xff] 0.0
      %64 = vst [vmem:[#allocation4] sm:$0xff] 0.0
    $region33: #{tpu_custom_call.1} parent=1 // pred_fallthru
      _
    %v65 = vld [vmem:[#allocation5] sm:$0xff]
    %v66 = vld [vmem:[#allocation5 + $0x8] sm:$0xff]
    %v67 = vld [vmem:[#allocation5 + $0x10] sm:$0xff]
    %v68 = vld [vmem:[#allocation5 + $0x18] sm:$0xff]
    %v69 = vld [vmem:[#allocation5 + $0x20] sm:$0xff]
    %v70 = vld [vmem:[#allocation5 + $0x28] sm:$0xff]
    %v71 = vld [vmem:[#allocation5 + $0x30] sm:$0xff]
    %v72 = vld [vmem:[#allocation5 + $0x38] sm:$0xff]
    %v73 = vld [vmem:[#allocation8] sm:$0xff]
    %v74 = vld [vmem:[#allocation8 + $0x8] sm:$0xff]
    %v75 = vld [vmem:[#allocation8 + $0x10] sm:$0xff]
    %v76 = vld [vmem:[#allocation8 + $0x18] sm:$0xff]
    %v77 = vld [vmem:[#allocation8 + $0x20] sm:$0xff]
    %v78 = vld [vmem:[#allocation8 + $0x28] sm:$0xff]
    %v79 = vld [vmem:[#allocation8 + $0x30] sm:$0xff]
    %v80 = vld [vmem:[#allocation8 + $0x38] sm:$0xff]
    %v81 = vld [vmem:[%s3] sm:$0xf]
    %v83 = vlaneseq
    %v84 = vshrl.u32 %v83, 7
    %v85 = vsub.s32 0, %v84
    %v86 = vrot.slane %v81, %v85
    %v87 = vlaneseq
    %v88 = vshrl.u32 %v87, 7
    %v89 = vsub.s32 1, %v88
    %v90 = vrot.slane %v81, %v89
    %v91 = vlaneseq
    %v92 = vshrl.u32 %v91, 7
    %v93 = vsub.s32 2, %v92
    %v94 = vrot.slane %v81, %v93
    %v95 = vlaneseq
    %v96 = vshrl.u32 %v95, 7
    %v97 = vsub.s32 3, %v96
    %v98 = vrot.slane %v81, %v97
    %vm103 = vcmask 130048
    %v105 = vsel %vm103, %v65, 0
    %v108 = vsel %vm103, %v66, 0
    %v111 = vsel %vm103, %v67, 0
    %v114 = vsel %vm103, %v68, 0
    %v117 = vsel %vm103, %v69, 0
    %v120 = vsel %vm103, %v70, 0
    %v123 = vsel %vm103, %v71, 0
    %v126 = vsel %vm103, %v72, 0
    %128 = vmatprep.subr.mxu0 %v74
    %129 = vmatpush1.msra.mxu0 %v73
    %130 = vmatprep.subr.mxu0 %v78
    %131 = vmatpush1.msra.mxu0 %v77
    %132 = vmatprep.subr.mxu0 0.0
    %133 = vmatpush1.msra.mxu0 0.0
    %134 = vmatprep.subr.mxu0 0.0
    %135 = vmatpush1.msra.mxu0 0.0
    %136 = vmatprep.subr.mxu0 0.0
    %137 = vmatpush1.msra.mxu0 0.0
    %138 = vmatprep.subr.mxu0 0.0
    %139 = vmatpush1.msra.mxu0 0.0
    %140 = vmatprep.subr.mxu0 0.0
    %141 = vmatpush1.msra.mxu0 0.0
    %142 = vmatprep.subr.mxu0 0.0
    %143 = vmatpush1.msra.mxu0 0.0
    %144 = vmatprep.subr.mxu0 0.0
    %145 = vmatpush1.msra.mxu0 0.0
    %146 = vmatprep.subr.mxu0 0.0
    %147 = vmatpush1.msra.mxu0 0.0
    %148 = vmatprep.subr.mxu0 0.0
    %149 = vmatpush1.msra.mxu0 0.0
    %150 = vmatprep.subr.mxu0 0.0
    %151 = vmatpush1.msra.mxu0 0.0
    %152 = vmatprep.subr.mxu0 0.0
    %153 = vmatpush1.msra.mxu0 0.0
    %154 = vmatprep.subr.mxu0 0.0
    %155 = vmatpush1.msra.mxu0 0.0
    %156 = vmatprep.subr.mxu0 0.0
    %157 = vmatpush1.msra.mxu0 0.0
    %158 = vmatprep.subr.mxu0 0.0
    %159 = vmatpush1.msra.mxu0 0.0
    %160 = vmatprep.subr.mxu0 0.0
    %161 = vmatpush1.msra.mxu0 0.0
    %162 = vmatprep.subr.mxu0 0.0
    %163 = vmatpush1.msra.mxu0 0.0
    %164 = vmatprep.subr.mxu0 0.0
    %165 = vmatpush1.msra.mxu0 0.0
    %166 = vmatprep.subr.mxu0 0.0
    %167 = vmatpush1.msra.mxu0 0.0
    %168 = vmatprep.subr.mxu0 0.0
    %169 = vmatpush1.msra.mxu0 0.0
    %170 = vmatprep.subr.mxu0 0.0
    %171 = vmatpush1.msra.mxu0 0.0
    %172 = vmatprep.subr.mxu0 0.0
    %173 = vmatpush1.msra.mxu0 0.0
    %174 = vmatprep.subr.mxu0 0.0
    %175 = vmatpush1.msra.mxu0 0.0
    %176 = vmatprep.subr.mxu0 0.0
    %177 = vmatpush1.msra.mxu0 0.0
    %178 = vmatprep.subr.mxu0 0.0
    %179 = vmatpush1.msra.mxu0 0.0
    %180 = vmatprep.subr.mxu0 0.0
    %181 = vmatpush1.msra.mxu0 0.0
    %182 = vmatprep.subr.mxu0 0.0
    %183 = vmatpush1.msra.mxu0 0.0
    %184 = vmatprep.subr.mxu0 0.0
    %185 = vmatpush1.msra.mxu0 0.0
    %186 = vmatprep.subr.mxu0 0.0
    %187 = vmatpush1.msra.mxu0 0.0
    %188 = vmatprep.subr.mxu0 0.0
    %189 = vmatpush1.msra.mxu0 0.0
    %190 = vmatprep.subr.mxu0 0.0
    %191 = vmatpush1.msra.mxu0 0.0
    %192 = vmatprep.mubr.f32.mxu0 0.0
    %193 = vmatmul.mubr.f32.gmra.mrb[0].mxu0 %v105
    %v194 = vpop.f32.mrb[0].mxu0
    %v195 = vadd.f32 %v86, %v194
    %v196 = vpop.f32.mrb[0].mxu0
    %v197 = vadd.f32 %v90, %v196
    %198 = vmatprep.mubr.f32.mxu0 0.0
    %199 = vmatmul.mubr.f32.gmra.mrb[0].mxu0 %v108
    %v200 = vpop.f32.mrb[0].mxu0
    %v201 = vadd.f32 %v86, %v200
    %v202 = vpop.f32.mrb[0].mxu0
    %v203 = vadd.f32 %v90, %v202
    %204 = vmatprep.mubr.f32.mxu0 0.0
    %205 = vmatmul.mubr.f32.gmra.mrb[0].mxu0 %v111
    %v206 = vpop.f32.mrb[0].mxu0
    %v207 = vadd.f32 %v86, %v206
    %v208 = vpop.f32.mrb[0].mxu0
    %v209 = vadd.f32 %v90, %v208
    %210 = vmatprep.mubr.f32.mxu0 0.0
    %211 = vmatmul.mubr.f32.gmra.mrb[0].mxu0 %v114
    %v212 = vpop.f32.mrb[0].mxu0
    %v213 = vadd.f32 %v86, %v212
    %v214 = vpop.f32.mrb[0].mxu0
    %v215 = vadd.f32 %v90, %v214
    %216 = vmatprep.mubr.f32.mxu0 0.0
    %217 = vmatmul.mubr.f32.gmra.mrb[0].mxu0 %v117
    %v218 = vpop.f32.mrb[0].mxu0
    %v219 = vadd.f32 %v86, %v218
    %v220 = vpop.f32.mrb[0].mxu0
    %v221 = vadd.f32 %v90, %v220
    %222 = vmatprep.mubr.f32.mxu0 0.0
    %223 = vmatmul.mubr.f32.gmra.mrb[0].mxu0 %v120
    %v224 = vpop.f32.mrb[0].mxu0
    %v225 = vadd.f32 %v86, %v224
    %v226 = vpop.f32.mrb[0].mxu0
    %v227 = vadd.f32 %v90, %v226
    %228 = vmatprep.mubr.f32.mxu0 0.0
    %229 = vmatmul.mubr.f32.gmra.mrb[0].mxu0 %v123
    %v230 = vpop.f32.mrb[0].mxu0
    %v231 = vadd.f32 %v86, %v230
    %v232 = vpop.f32.mrb[0].mxu0
    %v233 = vadd.f32 %v90, %v232
    %234 = vmatprep.mubr.f32.mxu0 0.0
    %235 = vmatmul.mubr.f32.gmra.mrb[0].mxu0 %v126
    %v236 = vpop.f32.mrb[0].mxu0
    %v237 = vadd.f32 %v86, %v236
    %v238 = vpop.f32.mrb[0].mxu0
    %v239 = vadd.f32 %v90, %v238
    %240 = vdwg.mxu0
    %241 = vmatprep.subr.mxu0 %v76
    %242 = vmatpush1.msra.mxu0 %v75
    %243 = vmatprep.subr.mxu0 %v80
    %244 = vmatpush1.msra.mxu0 %v79
    %245 = vmatprep.subr.mxu0 0.0
    %246 = vmatpush1.msra.mxu0 0.0
    %247 = vmatprep.subr.mxu0 0.0
    %248 = vmatpush1.msra.mxu0 0.0
    %249 = vmatprep.subr.mxu0 0.0
    %250 = vmatpush1.msra.mxu0 0.0
    %251 = vmatprep.subr.mxu0 0.0
    %252 = vmatpush1.msra.mxu0 0.0
    %253 = vmatprep.subr.mxu0 0.0
    %254 = vmatpush1.msra.mxu0 0.0
    %255 = vmatprep.subr.mxu0 0.0
    %256 = vmatpush1.msra.mxu0 0.0
    %257 = vmatprep.subr.mxu0 0.0
    %258 = vmatpush1.msra.mxu0 0.0
    %259 = vmatprep.subr.mxu0 0.0
    %260 = vmatpush1.msra.mxu0 0.0
    %261 = vmatprep.subr.mxu0 0.0
    %262 = vmatpush1.msra.mxu0 0.0
    %263 = vmatprep.subr.mxu0 0.0
    %264 = vmatpush1.msra.mxu0 0.0
    %265 = vmatprep.subr.mxu0 0.0
    %266 = vmatpush1.msra.mxu0 0.0
    %267 = vmatprep.subr.mxu0 0.0
    %268 = vmatpush1.msra.mxu0 0.0
    %269 = vmatprep.subr.mxu0 0.0
    %270 = vmatpush1.msra.mxu0 0.0
    %271 = vmatprep.subr.mxu0 0.0
    %272 = vmatpush1.msra.mxu0 0.0
    %273 = vmatprep.subr.mxu0 0.0
    %274 = vmatpush1.msra.mxu0 0.0
    %275 = vmatprep.subr.mxu0 0.0
    %276 = vmatpush1.msra.mxu0 0.0
    %277 = vmatprep.subr.mxu0 0.0
    %278 = vmatpush1.msra.mxu0 0.0
    %279 = vmatprep.subr.mxu0 0.0
    %280 = vmatpush1.msra.mxu0 0.0
    %281 = vmatprep.subr.mxu0 0.0
    %282 = vmatpush1.msra.mxu0 0.0
    %283 = vmatprep.subr.mxu0 0.0
    %284 = vmatpush1.msra.mxu0 0.0
    %285 = vmatprep.subr.mxu0 0.0
    %286 = vmatpush1.msra.mxu0 0.0
    %287 = vmatprep.subr.mxu0 0.0
    %288 = vmatpush1.msra.mxu0 0.0
    %289 = vmatprep.subr.mxu0 0.0
    %290 = vmatpush1.msra.mxu0 0.0
    %291 = vmatprep.subr.mxu0 0.0
    %292 = vmatpush1.msra.mxu0 0.0
    %293 = vmatprep.subr.mxu0 0.0
    %294 = vmatpush1.msra.mxu0 0.0
    %295 = vmatprep.subr.mxu0 0.0
    %296 = vmatpush1.msra.mxu0 0.0
    %297 = vmatprep.subr.mxu0 0.0
    %298 = vmatpush1.msra.mxu0 0.0
    %299 = vmatprep.subr.mxu0 0.0
    %300 = vmatpush1.msra.mxu0 0.0
    %301 = vmatprep.subr.mxu0 0.0
    %302 = vmatpush1.msra.mxu0 0.0
    %303 = vmatprep.subr.mxu0 0.0
    %304 = vmatpush1.msra.mxu0 0.0
    %305 = vmatprep.mubr.f32.mxu0 0.0
    %306 = vmatmul.mubr.f32.gmra.mrb[0].mxu0 %v105
    %v307 = vpop.f32.mrb[0].mxu0
    %v308 = vadd.f32 %v94, %v307
    %v309 = vpop.f32.mrb[0].mxu0
    %v310 = vadd.f32 %v98, %v309
    %311 = vmatprep.mubr.f32.mxu0 0.0
    %312 = vmatmul.mubr.f32.gmra.mrb[0].mxu0 %v108
    %v313 = vpop.f32.mrb[0].mxu0
    %v314 = vadd.f32 %v94, %v313
    %v315 = vpop.f32.mrb[0].mxu0
    %v316 = vadd.f32 %v98, %v315
    %317 = vmatprep.mubr.f32.mxu0 0.0
    %318 = vmatmul.mubr.f32.gmra.mrb[0].mxu0 %v111
    %v319 = vpop.f32.mrb[0].mxu0
    %v320 = vadd.f32 %v94, %v319
    %v321 = vpop.f32.mrb[0].mxu0
    %v322 = vadd.f32 %v98, %v321
    %323 = vmatprep.mubr.f32.mxu0 0.0
    %324 = vmatmul.mubr.f32.gmra.mrb[0].mxu0 %v114
    %v325 = vpop.f32.mrb[0].mxu0
    %v326 = vadd.f32 %v94, %v325
    %v327 = vpop.f32.mrb[0].mxu0
    %v328 = vadd.f32 %v98, %v327
    %329 = vmatprep.mubr.f32.mxu0 0.0
    %330 = vmatmul.mubr.f32.gmra.mrb[0].mxu0 %v117
    %v331 = vpop.f32.mrb[0].mxu0
    %v332 = vadd.f32 %v94, %v331
    %v333 = vpop.f32.mrb[0].mxu0
    %v334 = vadd.f32 %v98, %v333
    %335 = vmatprep.mubr.f32.mxu0 0.0
    %336 = vmatmul.mubr.f32.gmra.mrb[0].mxu0 %v120
    %v337 = vpop.f32.mrb[0].mxu0
    %v338 = vadd.f32 %v94, %v337
    %v339 = vpop.f32.mrb[0].mxu0
    %v340 = vadd.f32 %v98, %v339
    %341 = vmatprep.mubr.f32.mxu0 0.0
    %342 = vmatmul.mubr.f32.gmra.mrb[0].mxu0 %v123
    %v343 = vpop.f32.mrb[0].mxu0
    %v344 = vadd.f32 %v94, %v343
    %v345 = vpop.f32.mrb[0].mxu0
    %v346 = vadd.f32 %v98, %v345
    %347 = vmatprep.mubr.f32.mxu0 0.0
    %348 = vmatmul.mubr.f32.gmra.mrb[0].mxu0 %v126
    %v349 = vpop.f32.mrb[0].mxu0
    %v350 = vadd.f32 %v94, %v349
    %v351 = vpop.f32.mrb[0].mxu0
    %v352 = vadd.f32 %v98, %v351
    %353 = vdwg.mxu0
    %354 = vst [vmem:[#allocation2] sm:$0xff] %v195
    %355 = vst [vmem:[#allocation2 + $0x8] sm:$0xff] %v197
    %356 = vst [vmem:[#allocation2 + $0x10] sm:$0xff] %v308
    %357 = vst [vmem:[#allocation2 + $0x18] sm:$0xff] %v310
    %358 = vst [vmem:[#allocation2 + $0x20] sm:$0xff] %v201
    %359 = vst [vmem:[#allocation2 + $0x28] sm:$0xff] %v203
    %360 = vst [vmem:[#allocation2 + $0x30] sm:$0xff] %v314
    %361 = vst [vmem:[#allocation2 + $0x38] sm:$0xff] %v316
    %362 = vst [vmem:[#allocation2 + $0x40] sm:$0xff] %v207
    %363 = vst [vmem:[#allocation2 + $0x48] sm:$0xff] %v209
    %364 = vst [vmem:[#allocation2 + $0x50] sm:$0xff] %v320
    %365 = vst [vmem:[#allocation2 + $0x58] sm:$0xff] %v322
    %366 = vst [vmem:[#allocation2 + $0x60] sm:$0xff] %v213
    %367 = vst [vmem:[#allocation2 + $0x68] sm:$0xff] %v215
    %368 = vst [vmem:[#allocation2 + $0x70] sm:$0xff] %v326
    %369 = vst [vmem:[#allocation2 + $0x78] sm:$0xff] %v328
    %370 = vst [vmem:[#allocation2 + $0x80] sm:$0xff] %v219
    %371 = vst [vmem:[#allocation2 + $0x88] sm:$0xff] %v221
    %372 = vst [vmem:[#allocation2 + $0x90] sm:$0xff] %v332
    %373 = vst [vmem:[#allocation2 + $0x98] sm:$0xff] %v334
    %374 = vst [vmem:[#allocation2 + $0xa0] sm:$0xff] %v225
    %375 = vst [vmem:[#allocation2 + $0xa8] sm:$0xff] %v227
    %376 = vst [vmem:[#allocation2 + $0xb0] sm:$0xff] %v338
    %377 = vst [vmem:[#allocation2 + $0xb8] sm:$0xff] %v340
    %378 = vst [vmem:[#allocation2 + $0xc0] sm:$0xff] %v231
    %379 = vst [vmem:[#allocation2 + $0xc8] sm:$0xff] %v233
    %380 = vst [vmem:[#allocation2 + $0xd0] sm:$0xff] %v344
    %381 = vst [vmem:[#allocation2 + $0xd8] sm:$0xff] %v346
    %382 = vst [vmem:[#allocation2 + $0xe0] sm:$0xff] %v237
    %383 = vst [vmem:[#allocation2 + $0xe8] sm:$0xff] %v239
    %384 = vst [vmem:[#allocation2 + $0xf0] sm:$0xff] %v350
    %385 = vst [vmem:[#allocation2 + $0xf8] sm:$0xff] %v352
    %v386 = vld [vmem:[#allocation3] sm:$0xff]
    %v387 = vld [vmem:[#allocation4] sm:$0xff]
    %v388 = vld [vmem:[#allocation2] sm:$0xff]
    %v389 = vld [vmem:[#allocation2 + $0x8] sm:$0xff]
    %v390 = vld [vmem:[#allocation2 + $0x10] sm:$0xff]
    %v391 = vld [vmem:[#allocation2 + $0x18] sm:$0xff]
    %v392 = vld [vmem:[#allocation10] sm:$0xff]
    %v393 = vld [vmem:[#allocation10 + $0x8] sm:$0xff]
    %v394 = vld [vmem:[#allocation10 + $0x10] sm:$0xff]
    %v395 = vld [vmem:[#allocation10 + $0x18] sm:$0xff]
    %v396 = vld [vmem:[#allocation10 + $0x20] sm:$0xff]
    %v397 = vld [vmem:[#allocation10 + $0x28] sm:$0xff]
    %v398 = vld [vmem:[#allocation10 + $0x30] sm:$0xff]
    %v399 = vld [vmem:[#allocation10 + $0x38] sm:$0xff]
    %v400 = vld [vmem:[#allocation10 + $0x40] sm:$0xff]
    %v401 = vld [vmem:[#allocation10 + $0x48] sm:$0xff]
    %v402 = vld [vmem:[#allocation10 + $0x50] sm:$0xff]
    %v403 = vld [vmem:[#allocation10 + $0x58] sm:$0xff]
    %v404 = vld [vmem:[#allocation10 + $0x60] sm:$0xff]
    %v405 = vld [vmem:[#allocation10 + $0x68] sm:$0xff]
    %v406 = vld [vmem:[#allocation10 + $0x70] sm:$0xff]
    %v407 = vld [vmem:[#allocation10 + $0x78] sm:$0xff]
    %v408 = vld [vmem:[#allocation10 + $0x80] sm:$0xff]
    %v409 = vld [vmem:[#allocation10 + $0x88] sm:$0xff]
    %v410 = vld [vmem:[#allocation10 + $0x90] sm:$0xff]
    %v411 = vld [vmem:[#allocation10 + $0x98] sm:$0xff]
    %v412 = vld [vmem:[#allocation10 + $0xa0] sm:$0xff]
    %v413 = vld [vmem:[#allocation10 + $0xa8] sm:$0xff]
    %v414 = vld [vmem:[#allocation10 + $0xb0] sm:$0xff]
    %v415 = vld [vmem:[#allocation10 + $0xb8] sm:$0xff]
    %v416 = vld [vmem:[#allocation10 + $0xc0] sm:$0xff]
    %v417 = vld [vmem:[#allocation10 + $0xc8] sm:$0xff]
    %v418 = vld [vmem:[#allocation10 + $0xd0] sm:$0xff]
    %v419 = vld [vmem:[#allocation10 + $0xd8] sm:$0xff]
    %v420 = vld [vmem:[#allocation10 + $0xe0] sm:$0xff]
    %v421 = vld [vmem:[#allocation10 + $0xe8] sm:$0xff]
    %v422 = vld [vmem:[#allocation10 + $0xf0] sm:$0xff]
    %v423 = vld [vmem:[#allocation10 + $0xf8] sm:$0xff]
    %v424 = vld [vmem:[#allocation10 + $0x100] sm:$0xff]
    %v425 = vld [vmem:[#allocation10 + $0x108] sm:$0xff]
    %v426 = vld [vmem:[#allocation10 + $0x110] sm:$0xff]
    %v427 = vld [vmem:[#allocation10 + $0x118] sm:$0xff]
    %v428 = vld [vmem:[#allocation10 + $0x120] sm:$0xff]
    %v429 = vld [vmem:[#allocation10 + $0x128] sm:$0xff]
    %v430 = vld [vmem:[#allocation10 + $0x130] sm:$0xff]
    %v431 = vld [vmem:[#allocation10 + $0x138] sm:$0xff]
    %v432 = vld [vmem:[#allocation10 + $0x140] sm:$0xff]
    %v433 = vld [vmem:[#allocation10 + $0x148] sm:$0xff]
    %v434 = vld [vmem:[#allocation10 + $0x150] sm:$0xff]
    %v435 = vld [vmem:[#allocation10 + $0x158] sm:$0xff]
    %v436 = vld [vmem:[#allocation10 + $0x160] sm:$0xff]
    %v437 = vld [vmem:[#allocation10 + $0x168] sm:$0xff]
    %v438 = vld [vmem:[#allocation10 + $0x170] sm:$0xff]
    %v439 = vld [vmem:[#allocation10 + $0x178] sm:$0xff]
    %v440 = vld [vmem:[#allocation10 + $0x180] sm:$0xff]
    %v441 = vld [vmem:[#allocation10 + $0x188] sm:$0xff]
    %v442 = vld [vmem:[#allocation10 + $0x190] sm:$0xff]
    %v443 = vld [vmem:[#allocation10 + $0x198] sm:$0xff]
    %v444 = vld [vmem:[#allocation10 + $0x1a0] sm:$0xff]
    %v445 = vld [vmem:[#allocation10 + $0x1a8] sm:$0xff]
    %v446 = vld [vmem:[#allocation10 + $0x1b0] sm:$0xff]
    %v447 = vld [vmem:[#allocation10 + $0x1b8] sm:$0xff]
    %v448 = vld [vmem:[#allocation10 + $0x1c0] sm:$0xff]
    %v449 = vld [vmem:[#allocation10 + $0x1c8] sm:$0xff]
    %v450 = vld [vmem:[#allocation10 + $0x1d0] sm:$0xff]
    %v451 = vld [vmem:[#allocation10 + $0x1d8] sm:$0xff]
    %v452 = vld [vmem:[#allocation10 + $0x1e0] sm:$0xff]
    %v453 = vld [vmem:[#allocation10 + $0x1e8] sm:$0xff]
    %v454 = vld [vmem:[#allocation10 + $0x1f0] sm:$0xff]
    %v455 = vld [vmem:[#allocation10 + $0x1f8] sm:$0xff]
    %456 = vmatprep.subr.mxu0 %v393
    %457 = vmatpush1.msra.mxu0 %v392
    %458 = vmatprep.subr.mxu0 %v397
    %459 = vmatpush1.msra.mxu0 %v396
    %460 = vmatprep.subr.mxu0 %v401
    %461 = vmatpush1.msra.mxu0 %v400
    %462 = vmatprep.subr.mxu0 %v405
    %463 = vmatpush1.msra.mxu0 %v404
    %464 = vmatprep.subr.mxu0 %v409
    %465 = vmatpush1.msra.mxu0 %v408
    %466 = vmatprep.subr.mxu0 %v413
    %467 = vmatpush1.msra.mxu0 %v412
    %468 = vmatprep.subr.mxu0 %v417
    %469 = vmatpush1.msra.mxu0 %v416
    %470 = vmatprep.subr.mxu0 %v421
    %471 = vmatpush1.msra.mxu0 %v420
    %472 = vmatprep.subr.mxu0 %v425
    %473 = vmatpush1.msra.mxu0 %v424
    %474 = vmatprep.subr.mxu0 %v429
    %475 = vmatpush1.msra.mxu0 %v428
    %476 = vmatprep.subr.mxu0 %v433
    %477 = vmatpush1.msra.mxu0 %v432
    %478 = vmatprep.subr.mxu0 %v437
    %479 = vmatpush1.msra.mxu0 %v436
    %480 = vmatprep.subr.mxu0 %v441
    %481 = vmatpush1.msra.mxu0 %v440
    %482 = vmatprep.subr.mxu0 %v445
    %483 = vmatpush1.msra.mxu0 %v444
    %484 = vmatprep.subr.mxu0 %v449
    %485 = vmatpush1.msra.mxu0 %v448
    %486 = vmatprep.subr.mxu0 %v453
    %487 = vmatpush1.msra.mxu0 %v452
    %488 = vmatprep.subr.mxu0 0.0
    %489 = vmatpush1.msra.mxu0 0.0
    %490 = vmatprep.subr.mxu0 0.0
    %491 = vmatpush1.msra.mxu0 0.0
    %492 = vmatprep.subr.mxu0 0.0
    %493 = vmatpush1.msra.mxu0 0.0
    %494 = vmatprep.subr.mxu0 0.0
    %495 = vmatpush1.msra.mxu0 0.0
    %496 = vmatprep.subr.mxu0 0.0
    %497 = vmatpush1.msra.mxu0 0.0
    %498 = vmatprep.subr.mxu0 0.0
    %499 = vmatpush1.msra.mxu0 0.0
    %500 = vmatprep.subr.mxu0 0.0
    %501 = vmatpush1.msra.mxu0 0.0
    %502 = vmatprep.subr.mxu0 0.0
    %503 = vmatpush1.msra.mxu0 0.0
    %504 = vmatprep.subr.mxu0 0.0
    %505 = vmatpush1.msra.mxu0 0.0
    %506 = vmatprep.subr.mxu0 0.0
    %507 = vmatpush1.msra.mxu0 0.0
    %508 = vmatprep.subr.mxu0 0.0
    %509 = vmatpush1.msra.mxu0 0.0
    %510 = vmatprep.subr.mxu0 0.0
    %511 = vmatpush1.msra.mxu0 0.0
    %512 = vmatprep.subr.mxu0 0.0
    %513 = vmatpush1.msra.mxu0 0.0
    %514 = vmatprep.subr.mxu0 0.0
    %515 = vmatpush1.msra.mxu0 0.0
    %516 = vmatprep.subr.mxu0 0.0
    %517 = vmatpush1.msra.mxu0 0.0
    %518 = vmatprep.subr.mxu0 0.0
    %519 = vmatpush1.msra.mxu0 0.0
    %520 = vmatprep.mubr.f32.mxu0 0.0
    %521 = vmatmul.mubr.f32.gmra.mrb[0].mxu0 %v386
    %v522 = vpop.f32.mrb[0].mxu0
    %v523 = vadd.f32 0.0, %v522
    %v524 = vpop.f32.mrb[0].mxu0
    %v525 = vadd.f32 0.0, %v524
    %526 = vdwg.mxu0
    %527 = vmatprep.subr.mxu0 %v395
    %528 = vmatpush1.msra.mxu0 %v394
    %529 = vmatprep.subr.mxu0 %v399
    %530 = vmatpush1.msra.mxu0 %v398
    %531 = vmatprep.subr.mxu0 %v403
    %532 = vmatpush1.msra.mxu0 %v402
    %533 = vmatprep.subr.mxu0 %v407
    %534 = vmatpush1.msra.mxu0 %v406
    %535 = vmatprep.subr.mxu0 %v411
    %536 = vmatpush1.msra.mxu0 %v410
    %537 = vmatprep.subr.mxu0 %v415
    %538 = vmatpush1.msra.mxu0 %v414
    %539 = vmatprep.subr.mxu0 %v419
    %540 = vmatpush1.msra.mxu0 %v418
    %541 = vmatprep.subr.mxu0 %v423
    %542 = vmatpush1.msra.mxu0 %v422
    %543 = vmatprep.subr.mxu0 %v427
    %544 = vmatpush1.msra.mxu0 %v426
    %545 = vmatprep.subr.mxu0 %v431
    %546 = vmatpush1.msra.mxu0 %v430
    %547 = vmatprep.subr.mxu0 %v435
    %548 = vmatpush1.msra.mxu0 %v434
    %549 = vmatprep.subr.mxu0 %v439
    %550 = vmatpush1.msra.mxu0 %v438
    %551 = vmatprep.subr.mxu0 %v443
    %552 = vmatpush1.msra.mxu0 %v442
    %553 = vmatprep.subr.mxu0 %v447
    %554 = vmatpush1.msra.mxu0 %v446
    %555 = vmatprep.subr.mxu0 %v451
    %556 = vmatpush1.msra.mxu0 %v450
    %557 = vmatprep.subr.mxu0 %v455
    %558 = vmatpush1.msra.mxu0 %v454
    %559 = vmatprep.subr.mxu0 0.0
    %560 = vmatpush1.msra.mxu0 0.0
    %561 = vmatprep.subr.mxu0 0.0
    %562 = vmatpush1.msra.mxu0 0.0
    %563 = vmatprep.subr.mxu0 0.0
    %564 = vmatpush1.msra.mxu0 0.0
    %565 = vmatprep.subr.mxu0 0.0
    %566 = vmatpush1.msra.mxu0 0.0
    %567 = vmatprep.subr.mxu0 0.0
    %568 = vmatpush1.msra.mxu0 0.0
    %569 = vmatprep.subr.mxu0 0.0
    %570 = vmatpush1.msra.mxu0 0.0
    %571 = vmatprep.subr.mxu0 0.0
    %572 = vmatpush1.msra.mxu0 0.0
    %573 = vmatprep.subr.mxu0 0.0
    %574 = vmatpush1.msra.mxu0 0.0
    %575 = vmatprep.subr.mxu0 0.0
    %576 = vmatpush1.msra.mxu0 0.0
    %577 = vmatprep.subr.mxu0 0.0
    %578 = vmatpush1.msra.mxu0 0.0
    %579 = vmatprep.subr.mxu0 0.0
    %580 = vmatpush1.msra.mxu0 0.0
    %581 = vmatprep.subr.mxu0 0.0
    %582 = vmatpush1.msra.mxu0 0.0
    %583 = vmatprep.subr.mxu0 0.0
    %584 = vmatpush1.msra.mxu0 0.0
    %585 = vmatprep.subr.mxu0 0.0
    %586 = vmatpush1.msra.mxu0 0.0
    %587 = vmatprep.subr.mxu0 0.0
    %588 = vmatpush1.msra.mxu0 0.0
    %589 = vmatprep.subr.mxu0 0.0
    %590 = vmatpush1.msra.mxu0 0.0
    %591 = vmatprep.mubr.f32.mxu0 0.0
    %592 = vmatmul.mubr.f32.gmra.mrb[0].mxu0 %v386
    %v593 = vpop.f32.mrb[0].mxu0
    %v594 = vadd.f32 0.0, %v593
    %v595 = vpop.f32.mrb[0].mxu0
    %v596 = vadd.f32 0.0, %v595
    %597 = vdwg.mxu0
    %v598 = vadd.f32 %v388, %v523
    %v599 = vadd.f32 %v389, %v525
    %v600 = vadd.f32 %v390, %v594
    %v601 = vadd.f32 %v391, %v596
    %v602 = vmul.f32 %v598, 0.5
    %v603 = vmul.f32 %v599, 0.5
    %v604 = vmul.f32 %v600, 0.5
    %v605 = vtanh.pop %v602
    %v606 = vtanh.pop %v603
    %v607 = vtanh.pop %v604
    %v608 = vmul.f32 %v605, 0.5
    %v609 = vmul.f32 %v606, 0.5
    %v610 = vmul.f32 %v607, 0.5
    %v611 = vadd.f32 %v608, 0.5
    %v612 = vadd.f32 %v609, 0.5
    %v613 = vadd.f32 %v610, 0.5
    %v614 = vtanh.pop %v601
    %v615 = vmul.f32 %v612, %v387
    %v616 = vmul.f32 %v611, %v614
    %v617 = vadd.f32 %v615, %v616
    %v618 = vtanh.pop %v617
    %v619 = vmul.f32 %v613, %v618
    %620 = vst [vmem:[#allocation11] sm:$0xff] %v619
    %s621 = scalar_lea.vmem [#allocation2], 32
    %v622 = vld [vmem:[%s621] sm:$0xff]
    %v623 = vld [vmem:[%s621 + $0x8] sm:$0xff]
    %v624 = vld [vmem:[%s621 + $0x10] sm:$0xff]
    %v625 = vld [vmem:[%s621 + $0x18] sm:$0xff]
    %v626 = vld [vmem:[#allocation10] sm:$0xff]
    %v627 = vld [vmem:[#allocation10 + $0x8] sm:$0xff]
    %v628 = vld [vmem:[#allocation10 + $0x10] sm:$0xff]
    %v629 = vld [vmem:[#allocation10 + $0x18] sm:$0xff]
    %v630 = vld [vmem:[#allocation10 + $0x20] sm:$0xff]
    %v631 = vld [vmem:[#allocation10 + $0x28] sm:$0xff]
    %v632 = vld [vmem:[#allocation10 + $0x30] sm:$0xff]
    %v633 = vld [vmem:[#allocation10 + $0x38] sm:$0xff]
    %v634 = vld [vmem:[#allocation10 + $0x40] sm:$0xff]
    %v635 = vld [vmem:[#allocation10 + $0x48] sm:$0xff]
    %v636 = vld [vmem:[#allocation10 + $0x50] sm:$0xff]
    %v637 = vld [vmem:[#allocation10 + $0x58] sm:$0xff]
    %v638 = vld [vmem:[#allocation10 + $0x60] sm:$0xff]
    %v639 = vld [vmem:[#allocation10 + $0x68] sm:$0xff]
    %v640 = vld [vmem:[#allocation10 + $0x70] sm:$0xff]
    %v641 = vld [vmem:[#allocation10 + $0x78] sm:$0xff]
    %v642 = vld [vmem:[#allocation10 + $0x80] sm:$0xff]
    %v643 = vld [vmem:[#allocation10 + $0x88] sm:$0xff]
    %v644 = vld [vmem:[#allocation10 + $0x90] sm:$0xff]
    %v645 = vld [vmem:[#allocation10 + $0x98] sm:$0xff]
    %v646 = vld [vmem:[#allocation10 + $0xa0] sm:$0xff]
    %v647 = vld [vmem:[#allocation10 + $0xa8] sm:$0xff]
    %v648 = vld [vmem:[#allocation10 + $0xb0] sm:$0xff]
    %v649 = vld [vmem:[#allocation10 + $0xb8] sm:$0xff]
    %v650 = vld [vmem:[#allocation10 + $0xc0] sm:$0xff]
    %v651 = vld [vmem:[#allocation10 + $0xc8] sm:$0xff]
    %v652 = vld [vmem:[#allocation10 + $0xd0] sm:$0xff]
    %v653 = vld [vmem:[#allocation10 + $0xd8] sm:$0xff]
    %v654 = vld [vmem:[#allocation10 + $0xe0] sm:$0xff]
    %v655 = vld [vmem:[#allocation10 + $0xe8] sm:$0xff]
    %v656 = vld [vmem:[#allocation10 + $0xf0] sm:$0xff]
    %v657 = vld [vmem:[#allocation10 + $0xf8] sm:$0xff]
    %v658 = vld [vmem:[#allocation10 + $0x100] sm:$0xff]
    %v659 = vld [vmem:[#allocation10 + $0x108] sm:$0xff]
    %v660 = vld [vmem:[#allocation10 + $0x110] sm:$0xff]
    %v661 = vld [vmem:[#allocation10 + $0x118] sm:$0xff]
    %v662 = vld [vmem:[#allocation10 + $0x120] sm:$0xff]
    %v663 = vld [vmem:[#allocation10 + $0x128] sm:$0xff]
    %v664 = vld [vmem:[#allocation10 + $0x130] sm:$0xff]
    %v665 = vld [vmem:[#allocation10 + $0x138] sm:$0xff]
    %v666 = vld [vmem:[#allocation10 + $0x140] sm:$0xff]
    %v667 = vld [vmem:[#allocation10 + $0x148] sm:$0xff]
    %v668 = vld [vmem:[#allocation10 + $0x150] sm:$0xff]
    %v669 = vld [vmem:[#allocation10 + $0x158] sm:$0xff]
    %v670 = vld [vmem:[#allocation10 + $0x160] sm:$0xff]
    %v671 = vld [vmem:[#allocation10 + $0x168] sm:$0xff]
    %v672 = vld [vmem:[#allocation10 + $0x170] sm:$0xff]
    %v673 = vld [vmem:[#allocation10 + $0x178] sm:$0xff]
    %v674 = vld [vmem:[#allocation10 + $0x180] sm:$0xff]
    %v675 = vld [vmem:[#allocation10 + $0x188] sm:$0xff]
    %v676 = vld [vmem:[#allocation10 + $0x190] sm:$0xff]
    %v677 = vld [vmem:[#allocation10 + $0x198] sm:$0xff]
    %v678 = vld [vmem:[#allocation10 + $0x1a0] sm:$0xff]
    %v679 = vld [vmem:[#allocation10 + $0x1a8] sm:$0xff]
    %v680 = vld [vmem:[#allocation10 + $0x1b0] sm:$0xff]
    %v681 = vld [vmem:[#allocation10 + $0x1b8] sm:$0xff]
    %v682 = vld [vmem:[#allocation10 + $0x1c0] sm:$0xff]
    %v683 = vld [vmem:[#allocation10 + $0x1c8] sm:$0xff]
    %v684 = vld [vmem:[#allocation10 + $0x1d0] sm:$0xff]
    %v685 = vld [vmem:[#allocation10 + $0x1d8] sm:$0xff]
    %v686 = vld [vmem:[#allocation10 + $0x1e0] sm:$0xff]
    %v687 = vld [vmem:[#allocation10 + $0x1e8] sm:$0xff]
    %v688 = vld [vmem:[#allocation10 + $0x1f0] sm:$0xff]
    %v689 = vld [vmem:[#allocation10 + $0x1f8] sm:$0xff]
    %690 = vmatprep.subr.mxu0 %v627
    %691 = vmatpush1.msra.mxu0 %v626
    %692 = vmatprep.subr.mxu0 %v631
    %693 = vmatpush1.msra.mxu0 %v630
    %694 = vmatprep.subr.mxu0 %v635
    %695 = vmatpush1.msra.mxu0 %v634
    %696 = vmatprep.subr.mxu0 %v639
    %697 = vmatpush1.msra.mxu0 %v638
    %698 = vmatprep.subr.mxu0 %v643
    %699 = vmatpush1.msra.mxu0 %v642
    %700 = vmatprep.subr.mxu0 %v647
    %701 = vmatpush1.msra.mxu0 %v646
    %702 = vmatprep.subr.mxu0 %v651
    %703 = vmatpush1.msra.mxu0 %v650
    %704 = vmatprep.subr.mxu0 %v655
    %705 = vmatpush1.msra.mxu0 %v654
    %706 = vmatprep.subr.mxu0 %v659
    %707 = vmatpush1.msra.mxu0 %v658
    %708 = vmatprep.subr.mxu0 %v663
    %709 = vmatpush1.msra.mxu0 %v662
    %710 = vmatprep.subr.mxu0 %v667
    %711 = vmatpush1.msra.mxu0 %v666
    %712 = vmatprep.subr.mxu0 %v671
    %713 = vmatpush1.msra.mxu0 %v670
    %714 = vmatprep.subr.mxu0 %v675
    %715 = vmatpush1.msra.mxu0 %v674
    %716 = vmatprep.subr.mxu0 %v679
    %717 = vmatpush1.msra.mxu0 %v678
    %718 = vmatprep.subr.mxu0 %v683
    %719 = vmatpush1.msra.mxu0 %v682
    %720 = vmatprep.subr.mxu0 %v687
    %721 = vmatpush1.msra.mxu0 %v686
    %722 = vmatprep.subr.mxu0 0.0
    %723 = vmatpush1.msra.mxu0 0.0
    %724 = vmatprep.subr.mxu0 0.0
    %725 = vmatpush1.msra.mxu0 0.0
    %726 = vmatprep.subr.mxu0 0.0
    %727 = vmatpush1.msra.mxu0 0.0
    %728 = vmatprep.subr.mxu0 0.0
    %729 = vmatpush1.msra.mxu0 0.0
    %730 = vmatprep.subr.mxu0 0.0
    %731 = vmatpush1.msra.mxu0 0.0
    %732 = vmatprep.subr.mxu0 0.0
    %733 = vmatpush1.msra.mxu0 0.0
    %734 = vmatprep.subr.mxu0 0.0
    %735 = vmatpush1.msra.mxu0 0.0
    %736 = vmatprep.subr.mxu0 0.0
    %737 = vmatpush1.msra.mxu0 0.0
    %738 = vmatprep.subr.mxu0 0.0
    %739 = vmatpush1.msra.mxu0 0.0
    %740 = vmatprep.subr.mxu0 0.0
    %741 = vmatpush1.msra.mxu0 0.0
    %742 = vmatprep.subr.mxu0 0.0
    %743 = vmatpush1.msra.mxu0 0.0
    %744 = vmatprep.subr.mxu0 0.0
    %745 = vmatpush1.msra.mxu0 0.0
    %746 = vmatprep.subr.mxu0 0.0
    %747 = vmatpush1.msra.mxu0 0.0
    %748 = vmatprep.subr.mxu0 0.0
    %749 = vmatpush1.msra.mxu0 0.0
    %750 = vmatprep.subr.mxu0 0.0
    %751 = vmatpush1.msra.mxu0 0.0
    %752 = vmatprep.subr.mxu0 0.0
    %753 = vmatpush1.msra.mxu0 0.0
    %754 = vmatprep.mubr.f32.mxu0 0.0
    %755 = vmatmul.mubr.f32.gmra.mrb[0].mxu0 %v619
    %v756 = vpop.f32.mrb[0].mxu0
    %v757 = vadd.f32 0.0, %v756
    %v758 = vpop.f32.mrb[0].mxu0
    %v759 = vadd.f32 0.0, %v758
    %760 = vdwg.mxu0
    %761 = vmatprep.subr.mxu0 %v629
    %762 = vmatpush1.msra.mxu0 %v628
    %763 = vmatprep.subr.mxu0 %v633
    %764 = vmatpush1.msra.mxu0 %v632
    %765 = vmatprep.subr.mxu0 %v637
    %766 = vmatpush1.msra.mxu0 %v636
    %767 = vmatprep.subr.mxu0 %v641
    %768 = vmatpush1.msra.mxu0 %v640
    %769 = vmatprep.subr.mxu0 %v645
    %770 = vmatpush1.msra.mxu0 %v644
    %771 = vmatprep.subr.mxu0 %v649
    %772 = vmatpush1.msra.mxu0 %v648
    %773 = vmatprep.subr.mxu0 %v653
    %774 = vmatpush1.msra.mxu0 %v652
    %775 = vmatprep.subr.mxu0 %v657
    %776 = vmatpush1.msra.mxu0 %v656
    %777 = vmatprep.subr.mxu0 %v661
    %778 = vmatpush1.msra.mxu0 %v660
    %779 = vmatprep.subr.mxu0 %v665
    %780 = vmatpush1.msra.mxu0 %v664
    %781 = vmatprep.subr.mxu0 %v669
    %782 = vmatpush1.msra.mxu0 %v668
    %783 = vmatprep.subr.mxu0 %v673
    %784 = vmatpush1.msra.mxu0 %v672
    %785 = vmatprep.subr.mxu0 %v677
    %786 = vmatpush1.msra.mxu0 %v676
    %787 = vmatprep.subr.mxu0 %v681
    %788 = vmatpush1.msra.mxu0 %v680
    %789 = vmatprep.subr.mxu0 %v685
    %790 = vmatpush1.msra.mxu0 %v684
    %791 = vmatprep.subr.mxu0 %v689
    %792 = vmatpush1.msra.mxu0 %v688
    %793 = vmatprep.subr.mxu0 0.0
    %794 = vmatpush1.msra.mxu0 0.0
    %795 = vmatprep.subr.mxu0 0.0
    %796 = vmatpush1.msra.mxu0 0.0
    %797 = vmatprep.subr.mxu0 0.0
    %798 = vmatpush1.msra.mxu0 0.0
    %799 = vmatprep.subr.mxu0 0.0
    %800 = vmatpush1.msra.mxu0 0.0
    %801 = vmatprep.subr.mxu0 0.0
    %802 = vmatpush1.msra.mxu0 0.0
    %803 = vmatprep.subr.mxu0 0.0
    %804 = vmatpush1.msra.mxu0 0.0
    %805 = vmatprep.subr.mxu0 0.0
    %806 = vmatpush1.msra.mxu0 0.0
    %807 = vmatprep.subr.mxu0 0.0
    %808 = vmatpush1.msra.mxu0 0.0
    %809 = vmatprep.subr.mxu0 0.0
    %810 = vmatpush1.msra.mxu0 0.0
    %811 = vmatprep.subr.mxu0 0.0
    %812 = vmatpush1.msra.mxu0 0.0
    %813 = vmatprep.subr.mxu0 0.0
    %814 = vmatpush1.msra.mxu0 0.0
    %815 = vmatprep.subr.mxu0 0.0
    %816 = vmatpush1.msra.mxu0 0.0
    %817 = vmatprep.subr.mxu0 0.0
    %818 = vmatpush1.msra.mxu0 0.0
    %819 = vmatprep.subr.mxu0 0.0
    %820 = vmatpush1.msra.mxu0 0.0
    %821 = vmatprep.subr.mxu0 0.0
    %822 = vmatpush1.msra.mxu0 0.0
    %823 = vmatprep.subr.mxu0 0.0
    %824 = vmatpush1.msra.mxu0 0.0
    %825 = vmatprep.mubr.f32.mxu0 0.0
    %826 = vmatmul.mubr.f32.gmra.mrb[0].mxu0 %v619
    %v827 = vpop.f32.mrb[0].mxu0
    %v828 = vadd.f32 0.0, %v827
    %v829 = vpop.f32.mrb[0].mxu0
    %v830 = vadd.f32 0.0, %v829
    %831 = vdwg.mxu0
    %v832 = vadd.f32 %v622, %v757
    %v833 = vadd.f32 %v623, %v759
    %v834 = vadd.f32 %v624, %v828
    %v835 = vadd.f32 %v625, %v830
    %v836 = vmul.f32 %v832, 0.5
    %v837 = vmul.f32 %v833, 0.5
    %v838 = vmul.f32 %v834, 0.5
    %v839 = vtanh.pop %v836
    %v840 = vtanh.pop %v837
    %v841 = vtanh.pop %v838
    %v842 = vmul.f32 %v839, 0.5
    %v843 = vmul.f32 %v840, 0.5
    %v844 = vmul.f32 %v841, 0.5
    %v845 = vadd.f32 %v842, 0.5
    %v846 = vadd.f32 %v843, 0.5
    %v847 = vadd.f32 %v844, 0.5
    %v848 = vtanh.pop %v835
    %v849 = vmul.f32 %v846, %v617
    %v850 = vmul.f32 %v845, %v848
    %v851 = vadd.f32 %v849, %v850
    %v852 = vtanh.pop %v851
    %v853 = vmul.f32 %v847, %v852
    %s854 = scalar_lea.vmem [#allocation11], 8
    %855 = vst [vmem:[%s854] sm:$0xff] %v853
    %s856 = scalar_lea.vmem [#allocation2], 64
    %v857 = vld [vmem:[%s856] sm:$0xff]
    %v858 = vld [vmem:[%s856 + $0x8] sm:$0xff]
    %v859 = vld [vmem:[%s856 + $0x10] sm:$0xff]
    %v860 = vld [vmem:[%s856 + $0x18] sm:$0xff]
    %v861 = vld [vmem:[#allocation10] sm:$0xff]
    %v862 = vld [vmem:[#allocation10 + $0x8] sm:$0xff]
    %v863 = vld [vmem:[#allocation10 + $0x10] sm:$0xff]
    %v864 = vld [vmem:[#allocation10 + $0x18] sm:$0xff]
    %v865 = vld [vmem:[#allocation10 + $0x20] sm:$0xff]
    %v866 = vld [vmem:[#allocation10 + $0x28] sm:$0xff]
    %v867 = vld [vmem:[#allocation10 + $0x30] sm:$0xff]
    %v868 = vld [vmem:[#allocation10 + $0x38] sm:$0xff]
    %v869 = vld [vmem:[#allocation10 + $0x40] sm:$0xff]
    %v870 = vld [vmem:[#allocation10 + $0x48] sm:$0xff]
    %v871 = vld [vmem:[#allocation10 + $0x50] sm:$0xff]
    %v872 = vld [vmem:[#allocation10 + $0x58] sm:$0xff]
    %v873 = vld [vmem:[#allocation10 + $0x60] sm:$0xff]
    %v874 = vld [vmem:[#allocation10 + $0x68] sm:$0xff]
    %v875 = vld [vmem:[#allocation10 + $0x70] sm:$0xff]
    %v876 = vld [vmem:[#allocation10 + $0x78] sm:$0xff]
    %v877 = vld [vmem:[#allocation10 + $0x80] sm:$0xff]
    %v878 = vld [vmem:[#allocation10 + $0x88] sm:$0xff]
    %v879 = vld [vmem:[#allocation10 + $0x90] sm:$0xff]
    %v880 = vld [vmem:[#allocation10 + $0x98] sm:$0xff]
    %v881 = vld [vmem:[#allocation10 + $0xa0] sm:$0xff]
    %v882 = vld [vmem:[#allocation10 + $0xa8] sm:$0xff]
    %v883 = vld [vmem:[#allocation10 + $0xb0] sm:$0xff]
    %v884 = vld [vmem:[#allocation10 + $0xb8] sm:$0xff]
    %v885 = vld [vmem:[#allocation10 + $0xc0] sm:$0xff]
    %v886 = vld [vmem:[#allocation10 + $0xc8] sm:$0xff]
    %v887 = vld [vmem:[#allocation10 + $0xd0] sm:$0xff]
    %v888 = vld [vmem:[#allocation10 + $0xd8] sm:$0xff]
    %v889 = vld [vmem:[#allocation10 + $0xe0] sm:$0xff]
    %v890 = vld [vmem:[#allocation10 + $0xe8] sm:$0xff]
    %v891 = vld [vmem:[#allocation10 + $0xf0] sm:$0xff]
    %v892 = vld [vmem:[#allocation10 + $0xf8] sm:$0xff]
    %v893 = vld [vmem:[#allocation10 + $0x100] sm:$0xff]
    %v894 = vld [vmem:[#allocation10 + $0x108] sm:$0xff]
    %v895 = vld [vmem:[#allocation10 + $0x110] sm:$0xff]
    %v896 = vld [vmem:[#allocation10 + $0x118] sm:$0xff]
    %v897 = vld [vmem:[#allocation10 + $0x120] sm:$0xff]
    %v898 = vld [vmem:[#allocation10 + $0x128] sm:$0xff]
    %v899 = vld [vmem:[#allocation10 + $0x130] sm:$0xff]
    %v900 = vld [vmem:[#allocation10 + $0x138] sm:$0xff]
    %v901 = vld [vmem:[#allocation10 + $0x140] sm:$0xff]
    %v902 = vld [vmem:[#allocation10 + $0x148] sm:$0xff]
    %v903 = vld [vmem:[#allocation10 + $0x150] sm:$0xff]
    %v904 = vld [vmem:[#allocation10 + $0x158] sm:$0xff]
    %v905 = vld [vmem:[#allocation10 + $0x160] sm:$0xff]
    %v906 = vld [vmem:[#allocation10 + $0x168] sm:$0xff]
    %v907 = vld [vmem:[#allocation10 + $0x170] sm:$0xff]
    %v908 = vld [vmem:[#allocation10 + $0x178] sm:$0xff]
    %v909 = vld [vmem:[#allocation10 + $0x180] sm:$0xff]
    %v910 = vld [vmem:[#allocation10 + $0x188] sm:$0xff]
    %v911 = vld [vmem:[#allocation10 + $0x190] sm:$0xff]
    %v912 = vld [vmem:[#allocation10 + $0x198] sm:$0xff]
    %v913 = vld [vmem:[#allocation10 + $0x1a0] sm:$0xff]
    %v914 = vld [vmem:[#allocation10 + $0x1a8] sm:$0xff]
    %v915 = vld [vmem:[#allocation10 + $0x1b0] sm:$0xff]
    %v916 = vld [vmem:[#allocation10 + $0x1b8] sm:$0xff]
    %v917 = vld [vmem:[#allocation10 + $0x1c0] sm:$0xff]
    %v918 = vld [vmem:[#allocation10 + $0x1c8] sm:$0xff]
    %v919 = vld [vmem:[#allocation10 + $0x1d0] sm:$0xff]
    %v920 = vld [vmem:[#allocation10 + $0x1d8] sm:$0xff]
    %v921 = vld [vmem:[#allocation10 + $0x1e0] sm:$0xff]
    %v922 = vld [vmem:[#allocation10 + $0x1e8] sm:$0xff]
    %v923 = vld [vmem:[#allocation10 + $0x1f0] sm:$0xff]
    %v924 = vld [vmem:[#allocation10 + $0x1f8] sm:$0xff]
    %925 = vmatprep.subr.mxu0 %v862
    %926 = vmatpush1.msra.mxu0 %v861
    %927 = vmatprep.subr.mxu0 %v866
    %928 = vmatpush1.msra.mxu0 %v865
    %929 = vmatprep.subr.mxu0 %v870
    %930 = vmatpush1.msra.mxu0 %v869
    %931 = vmatprep.subr.mxu0 %v874
    %932 = vmatpush1.msra.mxu0 %v873
    %933 = vmatprep.subr.mxu0 %v878
    %934 = vmatpush1.msra.mxu0 %v877
    %935 = vmatprep.subr.mxu0 %v882
    %936 = vmatpush1.msra.mxu0 %v881
    %937 = vmatprep.subr.mxu0 %v886
    %938 = vmatpush1.msra.mxu0 %v885
    %939 = vmatprep.subr.mxu0 %v890
    %940 = vmatpush1.msra.mxu0 %v889
    %941 = vmatprep.subr.mxu0 %v894
    %942 = vmatpush1.msra.mxu0 %v893
    %943 = vmatprep.subr.mxu0 %v898
    %944 = vmatpush1.msra.mxu0 %v897
    %945 = vmatprep.subr.mxu0 %v902
    %946 = vmatpush1.msra.mxu0 %v901
    %947 = vmatprep.subr.mxu0 %v906
    %948 = vmatpush1.msra.mxu0 %v905
    %949 = vmatprep.subr.mxu0 %v910
    %950 = vmatpush1.msra.mxu0 %v909
    %951 = vmatprep.subr.mxu0 %v914
    %952 = vmatpush1.msra.mxu0 %v913
    %953 = vmatprep.subr.mxu0 %v918
    %954 = vmatpush1.msra.mxu0 %v917
    %955 = vmatprep.subr.mxu0 %v922
    %956 = vmatpush1.msra.mxu0 %v921
    %957 = vmatprep.subr.mxu0 0.0
    %958 = vmatpush1.msra.mxu0 0.0
    %959 = vmatprep.subr.mxu0 0.0
    %960 = vmatpush1.msra.mxu0 0.0
    %961 = vmatprep.subr.mxu0 0.0
    %962 = vmatpush1.msra.mxu0 0.0
    %963 = vmatprep.subr.mxu0 0.0
    %964 = vmatpush1.msra.mxu0 0.0
    %965 = vmatprep.subr.mxu0 0.0
    %966 = vmatpush1.msra.mxu0 0.0
    %967 = vmatprep.subr.mxu0 0.0
    %968 = vmatpush1.msra.mxu0 0.0
    %969 = vmatprep.subr.mxu0 0.0
    %970 = vmatpush1.msra.mxu0 0.0
    %971 = vmatprep.subr.mxu0 0.0
    %972 = vmatpush1.msra.mxu0 0.0
    %973 = vmatprep.subr.mxu0 0.0
    %974 = vmatpush1.msra.mxu0 0.0
    %975 = vmatprep.subr.mxu0 0.0
    %976 = vmatpush1.msra.mxu0 0.0
    %977 = vmatprep.subr.mxu0 0.0
    %978 = vmatpush1.msra.mxu0 0.0
    %979 = vmatprep.subr.mxu0 0.0
    %980 = vmatpush1.msra.mxu0 0.0
    %981 = vmatprep.subr.mxu0 0.0
    %982 = vmatpush1.msra.mxu0 0.0
    %983 = vmatprep.subr.mxu0 0.0
    %984 = vmatpush1.msra.mxu0 0.0
    %985 = vmatprep.subr.mxu0 0.0
    %986 = vmatpush1.msra.mxu0 0.0
    %987 = vmatprep.subr.mxu0 0.0
    %988 = vmatpush1.msra.mxu0 0.0
    %989 = vmatprep.mubr.f32.mxu0 0.0
    %990 = vmatmul.mubr.f32.gmra.mrb[0].mxu0 %v853
    %v991 = vpop.f32.mrb[0].mxu0
    %v992 = vadd.f32 0.0, %v991
    %v993 = vpop.f32.mrb[0].mxu0
    %v994 = vadd.f32 0.0, %v993
    %995 = vdwg.mxu0
    %996 = vmatprep.subr.mxu0 %v864
    %997 = vmatpush1.msra.mxu0 %v863
    %998 = vmatprep.subr.mxu0 %v868
    %999 = vmatpush1.msra.mxu0 %v867
    %1000 = vmatprep.subr.mxu0 %v872
    %1001 = vmatpush1.msra.mxu0 %v871
    %1002 = vmatprep.subr.mxu0 %v876
    %1003 = vmatpush1.msra.mxu0 %v875
    %1004 = vmatprep.subr.mxu0 %v880
    %1005 = vmatpush1.msra.mxu0 %v879
    %1006 = vmatprep.subr.mxu0 %v884
    %1007 = vmatpush1.msra.mxu0 %v883
    %1008 = vmatprep.subr.mxu0 %v888
    %1009 = vmatpush1.msra.mxu0 %v887
    %1010 = vmatprep.subr.mxu0 %v892
    %1011 = vmatpush1.msra.mxu0 %v891
    %1012 = vmatprep.subr.mxu0 %v896
    %1013 = vmatpush1.msra.mxu0 %v895
    %1014 = vmatprep.subr.mxu0 %v900
    %1015 = vmatpush1.msra.mxu0 %v899
    %1016 = vmatprep.subr.mxu0 %v904
    %1017 = vmatpush1.msra.mxu0 %v903
    %1018 = vmatprep.subr.mxu0 %v908
    %1019 = vmatpush1.msra.mxu0 %v907
    %1020 = vmatprep.subr.mxu0 %v912
    %1021 = vmatpush1.msra.mxu0 %v911
    %1022 = vmatprep.subr.mxu0 %v916
    %1023 = vmatpush1.msra.mxu0 %v915
    %1024 = vmatprep.subr.mxu0 %v920
    %1025 = vmatpush1.msra.mxu0 %v919
    %1026 = vmatprep.subr.mxu0 %v924
    %1027 = vmatpush1.msra.mxu0 %v923
    %1028 = vmatprep.subr.mxu0 0.0
    %1029 = vmatpush1.msra.mxu0 0.0
    %1030 = vmatprep.subr.mxu0 0.0
    %1031 = vmatpush1.msra.mxu0 0.0
    %1032 = vmatprep.subr.mxu0 0.0
    %1033 = vmatpush1.msra.mxu0 0.0
    %1034 = vmatprep.subr.mxu0 0.0
    %1035 = vmatpush1.msra.mxu0 0.0
    %1036 = vmatprep.subr.mxu0 0.0
    %1037 = vmatpush1.msra.mxu0 0.0
    %1038 = vmatprep.subr.mxu0 0.0
    %1039 = vmatpush1.msra.mxu0 0.0
    %1040 = vmatprep.subr.mxu0 0.0
    %1041 = vmatpush1.msra.mxu0 0.0
    %1042 = vmatprep.subr.mxu0 0.0
    %1043 = vmatpush1.msra.mxu0 0.0
    %1044 = vmatprep.subr.mxu0 0.0
    %1045 = vmatpush1.msra.mxu0 0.0
    %1046 = vmatprep.subr.mxu0 0.0
    %1047 = vmatpush1.msra.mxu0 0.0
    %1048 = vmatprep.subr.mxu0 0.0
    %1049 = vmatpush1.msra.mxu0 0.0
    %1050 = vmatprep.subr.mxu0 0.0
    %1051 = vmatpush1.msra.mxu0 0.0
    %1052 = vmatprep.subr.mxu0 0.0
    %1053 = vmatpush1.msra.mxu0 0.0
    %1054 = vmatprep.subr.mxu0 0.0
    %1055 = vmatpush1.msra.mxu0 0.0
    %1056 = vmatprep.subr.mxu0 0.0
    %1057 = vmatpush1.msra.mxu0 0.0
    %1058 = vmatprep.subr.mxu0 0.0
    %1059 = vmatpush1.msra.mxu0 0.0
    %1060 = vmatprep.mubr.f32.mxu0 0.0
    %1061 = vmatmul.mubr.f32.gmra.mrb[0].mxu0 %v853
    %v1062 = vpop.f32.mrb[0].mxu0
    %v1063 = vadd.f32 0.0, %v1062
    %v1064 = vpop.f32.mrb[0].mxu0
    %v1065 = vadd.f32 0.0, %v1064
    %1066 = vdwg.mxu0
    %v1067 = vadd.f32 %v857, %v992
    %v1068 = vadd.f32 %v858, %v994
    %v1069 = vadd.f32 %v859, %v1063
    %v1070 = vadd.f32 %v860, %v1065
    %v1071 = vmul.f32 %v1067, 0.5
    %v1072 = vmul.f32 %v1068, 0.5
    %v1073 = vmul.f32 %v1069, 0.5
    %v1074 = vtanh.pop %v1071
    %v1075 = vtanh.pop %v1072
    %v1076 = vtanh.pop %v1073
    %v1077 = vmul.f32 %v1074, 0.5
    %v1078 = vmul.f32 %v1075, 0.5
    %v1079 = vmul.f32 %v1076, 0.5
    %v1080 = vadd.f32 %v1077, 0.5
    %v1081 = vadd.f32 %v1078, 0.5
    %v1082 = vadd.f32 %v1079, 0.5
    %v1083 = vtanh.pop %v1070
    %v1084 = vmul.f32 %v1081, %v851
    %v1085 = vmul.f32 %v1080, %v1083
    %v1086 = vadd.f32 %v1084, %v1085
    %v1087 = vtanh.pop %v1086
    %v1088 = vmul.f32 %v1082, %v1087
    %s1089 = scalar_lea.vmem [#allocation11], 16
    %1090 = vst [vmem:[%s1089] sm:$0xff] %v1088
    %s1091 = scalar_lea.vmem [#allocation2], 96
    %v1092 = vld [vmem:[%s1091] sm:$0xff]
    %v1093 = vld [vmem:[%s1091 + $0x8] sm:$0xff]
    %v1094 = vld [vmem:[%s1091 + $0x10] sm:$0xff]
    %v1095 = vld [vmem:[%s1091 + $0x18] sm:$0xff]
    %v1096 = vld [vmem:[#allocation10] sm:$0xff]
    %v1097 = vld [vmem:[#allocation10 + $0x8] sm:$0xff]
    %v1098 = vld [vmem:[#allocation10 + $0x10] sm:$0xff]
    %v1099 = vld [vmem:[#allocation10 + $0x18] sm:$0xff]
    %v1100 = vld [vmem:[#allocation10 + $0x20] sm:$0xff]
    %v1101 = vld [vmem:[#allocation10 + $0x28] sm:$0xff]
    %v1102 = vld [vmem:[#allocation10 + $0x30] sm:$0xff]
    %v1103 = vld [vmem:[#allocation10 + $0x38] sm:$0xff]
    %v1104 = vld [vmem:[#allocation10 + $0x40] sm:$0xff]
    %v1105 = vld [vmem:[#allocation10 + $0x48] sm:$0xff]
    %v1106 = vld [vmem:[#allocation10 + $0x50] sm:$0xff]
    %v1107 = vld [vmem:[#allocation10 + $0x58] sm:$0xff]
    %v1108 = vld [vmem:[#allocation10 + $0x60] sm:$0xff]
    %v1109 = vld [vmem:[#allocation10 + $0x68] sm:$0xff]
    %v1110 = vld [vmem:[#allocation10 + $0x70] sm:$0xff]
    %v1111 = vld [vmem:[#allocation10 + $0x78] sm:$0xff]
    %v1112 = vld [vmem:[#allocation10 + $0x80] sm:$0xff]
    %v1113 = vld [vmem:[#allocation10 + $0x88] sm:$0xff]
    %v1114 = vld [vmem:[#allocation10 + $0x90] sm:$0xff]
    %v1115 = vld [vmem:[#allocation10 + $0x98] sm:$0xff]
    %v1116 = vld [vmem:[#allocation10 + $0xa0] sm:$0xff]
    %v1117 = vld [vmem:[#allocation10 + $0xa8] sm:$0xff]
    %v1118 = vld [vmem:[#allocation10 + $0xb0] sm:$0xff]
    %v1119 = vld [vmem:[#allocation10 + $0xb8] sm:$0xff]
    %v1120 = vld [vmem:[#allocation10 + $0xc0] sm:$0xff]
    %v1121 = vld [vmem:[#allocation10 + $0xc8] sm:$0xff]
    %v1122 = vld [vmem:[#allocation10 + $0xd0] sm:$0xff]
    %v1123 = vld [vmem:[#allocation10 + $0xd8] sm:$0xff]
    %v1124 = vld [vmem:[#allocation10 + $0xe0] sm:$0xff]
    %v1125 = vld [vmem:[#allocation10 + $0xe8] sm:$0xff]
    %v1126 = vld [vmem:[#allocation10 + $0xf0] sm:$0xff]
    %v1127 = vld [vmem:[#allocation10 + $0xf8] sm:$0xff]
    %v1128 = vld [vmem:[#allocation10 + $0x100] sm:$0xff]
    %v1129 = vld [vmem:[#allocation10 + $0x108] sm:$0xff]
    %v1130 = vld [vmem:[#allocation10 + $0x110] sm:$0xff]
    %v1131 = vld [vmem:[#allocation10 + $0x118] sm:$0xff]
    %v1132 = vld [vmem:[#allocation10 + $0x120] sm:$0xff]
    %v1133 = vld [vmem:[#allocation10 + $0x128] sm:$0xff]
    %v1134 = vld [vmem:[#allocation10 + $0x130] sm:$0xff]
    %v1135 = vld [vmem:[#allocation10 + $0x138] sm:$0xff]
    %v1136 = vld [vmem:[#allocation10 + $0x140] sm:$0xff]
    %v1137 = vld [vmem:[#allocation10 + $0x148] sm:$0xff]
    %v1138 = vld [vmem:[#allocation10 + $0x150] sm:$0xff]
    %v1139 = vld [vmem:[#allocation10 + $0x158] sm:$0xff]
    %v1140 = vld [vmem:[#allocation10 + $0x160] sm:$0xff]
    %v1141 = vld [vmem:[#allocation10 + $0x168] sm:$0xff]
    %v1142 = vld [vmem:[#allocation10 + $0x170] sm:$0xff]
    %v1143 = vld [vmem:[#allocation10 + $0x178] sm:$0xff]
    %v1144 = vld [vmem:[#allocation10 + $0x180] sm:$0xff]
    %v1145 = vld [vmem:[#allocation10 + $0x188] sm:$0xff]
    %v1146 = vld [vmem:[#allocation10 + $0x190] sm:$0xff]
    %v1147 = vld [vmem:[#allocation10 + $0x198] sm:$0xff]
    %v1148 = vld [vmem:[#allocation10 + $0x1a0] sm:$0xff]
    %v1149 = vld [vmem:[#allocation10 + $0x1a8] sm:$0xff]
    %v1150 = vld [vmem:[#allocation10 + $0x1b0] sm:$0xff]
    %v1151 = vld [vmem:[#allocation10 + $0x1b8] sm:$0xff]
    %v1152 = vld [vmem:[#allocation10 + $0x1c0] sm:$0xff]
    %v1153 = vld [vmem:[#allocation10 + $0x1c8] sm:$0xff]
    %v1154 = vld [vmem:[#allocation10 + $0x1d0] sm:$0xff]
    %v1155 = vld [vmem:[#allocation10 + $0x1d8] sm:$0xff]
    %v1156 = vld [vmem:[#allocation10 + $0x1e0] sm:$0xff]
    %v1157 = vld [vmem:[#allocation10 + $0x1e8] sm:$0xff]
    %v1158 = vld [vmem:[#allocation10 + $0x1f0] sm:$0xff]
    %v1159 = vld [vmem:[#allocation10 + $0x1f8] sm:$0xff]
    %1160 = vmatprep.subr.mxu0 %v1097
    %1161 = vmatpush1.msra.mxu0 %v1096
    %1162 = vmatprep.subr.mxu0 %v1101
    %1163 = vmatpush1.msra.mxu0 %v1100
    %1164 = vmatprep.subr.mxu0 %v1105
    %1165 = vmatpush1.msra.mxu0 %v1104
    %1166 = vmatprep.subr.mxu0 %v1109
    %1167 = vmatpush1.msra.mxu0 %v1108
    %1168 = vmatprep.subr.mxu0 %v1113
    %1169 = vmatpush1.msra.mxu0 %v1112
    %1170 = vmatprep.subr.mxu0 %v1117
    %1171 = vmatpush1.msra.mxu0 %v1116
    %1172 = vmatprep.subr.mxu0 %v1121
    %1173 = vmatpush1.msra.mxu0 %v1120
    %1174 = vmatprep.subr.mxu0 %v1125
    %1175 = vmatpush1.msra.mxu0 %v1124
    %1176 = vmatprep.subr.mxu0 %v1129
    %1177 = vmatpush1.msra.mxu0 %v1128
    %1178 = vmatprep.subr.mxu0 %v1133
    %1179 = vmatpush1.msra.mxu0 %v1132
    %1180 = vmatprep.subr.mxu0 %v1137
    %1181 = vmatpush1.msra.mxu0 %v1136
    %1182 = vmatprep.subr.mxu0 %v1141
    %1183 = vmatpush1.msra.mxu0 %v1140
    %1184 = vmatprep.subr.mxu0 %v1145
    %1185 = vmatpush1.msra.mxu0 %v1144
    %1186 = vmatprep.subr.mxu0 %v1149
    %1187 = vmatpush1.msra.mxu0 %v1148
    %1188 = vmatprep.subr.mxu0 %v1153
    %1189 = vmatpush1.msra.mxu0 %v1152
    %1190 = vmatprep.subr.mxu0 %v1157
    %1191 = vmatpush1.msra.mxu0 %v1156
    %1192 = vmatprep.subr.mxu0 0.0
    %1193 = vmatpush1.msra.mxu0 0.0
    %1194 = vmatprep.subr.mxu0 0.0
    %1195 = vmatpush1.msra.mxu0 0.0
    %1196 = vmatprep.subr.mxu0 0.0
    %1197 = vmatpush1.msra.mxu0 0.0
    %1198 = vmatprep.subr.mxu0 0.0
    %1199 = vmatpush1.msra.mxu0 0.0
    %1200 = vmatprep.subr.mxu0 0.0
    %1201 = vmatpush1.msra.mxu0 0.0
    %1202 = vmatprep.subr.mxu0 0.0
    %1203 = vmatpush1.msra.mxu0 0.0
    %1204 = vmatprep.subr.mxu0 0.0
    %1205 = vmatpush1.msra.mxu0 0.0
    %1206 = vmatprep.subr.mxu0 0.0
    %1207 = vmatpush1.msra.mxu0 0.0
    %1208 = vmatprep.subr.mxu0 0.0
    %1209 = vmatpush1.msra.mxu0 0.0
    %1210 = vmatprep.subr.mxu0 0.0
    %1211 = vmatpush1.msra.mxu0 0.0
    %1212 = vmatprep.subr.mxu0 0.0
    %1213 = vmatpush1.msra.mxu0 0.0
    %1214 = vmatprep.subr.mxu0 0.0
    %1215 = vmatpush1.msra.mxu0 0.0
    %1216 = vmatprep.subr.mxu0 0.0
    %1217 = vmatpush1.msra.mxu0 0.0
    %1218 = vmatprep.subr.mxu0 0.0
    %1219 = vmatpush1.msra.mxu0 0.0
    %1220 = vmatprep.subr.mxu0 0.0
    %1221 = vmatpush1.msra.mxu0 0.0
    %1222 = vmatprep.subr.mxu0 0.0
    %1223 = vmatpush1.msra.mxu0 0.0
    %1224 = vmatprep.mubr.f32.mxu0 0.0
    %1225 = vmatmul.mubr.f32.gmra.mrb[0].mxu0 %v1088
    %v1226 = vpop.f32.mrb[0].mxu0
    %v1227 = vadd.f32 0.0, %v1226
    %v1228 = vpop.f32.mrb[0].mxu0
    %v1229 = vadd.f32 0.0, %v1228
    %1230 = vdwg.mxu0
    %1231 = vmatprep.subr.mxu0 %v1099
    %1232 = vmatpush1.msra.mxu0 %v1098
    %1233 = vmatprep.subr.mxu0 %v1103
    %1234 = vmatpush1.msra.mxu0 %v1102
    %1235 = vmatprep.subr.mxu0 %v1107
    %1236 = vmatpush1.msra.mxu0 %v1106
    %1237 = vmatprep.subr.mxu0 %v1111
    %1238 = vmatpush1.msra.mxu0 %v1110
    %1239 = vmatprep.subr.mxu0 %v1115
    %1240 = vmatpush1.msra.mxu0 %v1114
    %1241 = vmatprep.subr.mxu0 %v1119
    %1242 = vmatpush1.msra.mxu0 %v1118
    %1243 = vmatprep.subr.mxu0 %v1123
    %1244 = vmatpush1.msra.mxu0 %v1122
    %1245 = vmatprep.subr.mxu0 %v1127
    %1246 = vmatpush1.msra.mxu0 %v1126
    %1247 = vmatprep.subr.mxu0 %v1131
    %1248 = vmatpush1.msra.mxu0 %v1130
    %1249 = vmatprep.subr.mxu0 %v1135
    %1250 = vmatpush1.msra.mxu0 %v1134
    %1251 = vmatprep.subr.mxu0 %v1139
    %1252 = vmatpush1.msra.mxu0 %v1138
    %1253 = vmatprep.subr.mxu0 %v1143
    %1254 = vmatpush1.msra.mxu0 %v1142
    %1255 = vmatprep.subr.mxu0 %v1147
    %1256 = vmatpush1.msra.mxu0 %v1146
    %1257 = vmatprep.subr.mxu0 %v1151
    %1258 = vmatpush1.msra.mxu0 %v1150
    %1259 = vmatprep.subr.mxu0 %v1155
    %1260 = vmatpush1.msra.mxu0 %v1154
    %1261 = vmatprep.subr.mxu0 %v1159
    %1262 = vmatpush1.msra.mxu0 %v1158
    %1263 = vmatprep.subr.mxu0 0.0
    %1264 = vmatpush1.msra.mxu0 0.0
    %1265 = vmatprep.subr.mxu0 0.0
    %1266 = vmatpush1.msra.mxu0 0.0
    %1267 = vmatprep.subr.mxu0 0.0
    %1268 = vmatpush1.msra.mxu0 0.0
    %1269 = vmatprep.subr.mxu0 0.0
    %1270 = vmatpush1.msra.mxu0 0.0
    %1271 = vmatprep.subr.mxu0 0.0
    %1272 = vmatpush1.msra.mxu0 0.0
    %1273 = vmatprep.subr.mxu0 0.0
    %1274 = vmatpush1.msra.mxu0 0.0
    %1275 = vmatprep.subr.mxu0 0.0
    %1276 = vmatpush1.msra.mxu0 0.0
    %1277 = vmatprep.subr.mxu0 0.0
    %1278 = vmatpush1.msra.mxu0 0.0
    %1279 = vmatprep.subr.mxu0 0.0
    %1280 = vmatpush1.msra.mxu0 0.0
    %1281 = vmatprep.subr.mxu0 0.0
    %1282 = vmatpush1.msra.mxu0 0.0
    %1283 = vmatprep.subr.mxu0 0.0
    %1284 = vmatpush1.msra.mxu0 0.0
    %1285 = vmatprep.subr.mxu0 0.0
    %1286 = vmatpush1.msra.mxu0 0.0
    %1287 = vmatprep.subr.mxu0 0.0
    %1288 = vmatpush1.msra.mxu0 0.0
    %1289 = vmatprep.subr.mxu0 0.0
    %1290 = vmatpush1.msra.mxu0 0.0
    %1291 = vmatprep.subr.mxu0 0.0
    %1292 = vmatpush1.msra.mxu0 0.0
    %1293 = vmatprep.subr.mxu0 0.0
    %1294 = vmatpush1.msra.mxu0 0.0
    %1295 = vmatprep.mubr.f32.mxu0 0.0
    %1296 = vmatmul.mubr.f32.gmra.mrb[0].mxu0 %v1088
    %v1297 = vpop.f32.mrb[0].mxu0
    %v1298 = vadd.f32 0.0, %v1297
    %v1299 = vpop.f32.mrb[0].mxu0
    %v1300 = vadd.f32 0.0, %v1299
    %1301 = vdwg.mxu0
    %v1302 = vadd.f32 %v1092, %v1227
    %v1303 = vadd.f32 %v1093, %v1229
    %v1304 = vadd.f32 %v1094, %v1298
    %v1305 = vadd.f32 %v1095, %v1300
    %v1306 = vmul.f32 %v1302, 0.5
    %v1307 = vmul.f32 %v1303, 0.5
    %v1308 = vmul.f32 %v1304, 0.5
    %v1309 = vtanh.pop %v1306
    %v1310 = vtanh.pop %v1307
    %v1311 = vtanh.pop %v1308
    %v1312 = vmul.f32 %v1309, 0.5
    %v1313 = vmul.f32 %v1310, 0.5
    %v1314 = vmul.f32 %v1311, 0.5
    %v1315 = vadd.f32 %v1312, 0.5
    %v1316 = vadd.f32 %v1313, 0.5
    %v1317 = vadd.f32 %v1314, 0.5
    %v1318 = vtanh.pop %v1305
    %v1319 = vmul.f32 %v1316, %v1086
    %v1320 = vmul.f32 %v1315, %v1318
    %v1321 = vadd.f32 %v1319, %v1320
    %v1322 = vtanh.pop %v1321
    %v1323 = vmul.f32 %v1317, %v1322
    %s1324 = scalar_lea.vmem [#allocation11], 24
    %1325 = vst [vmem:[%s1324] sm:$0xff] %v1323
    %s1326 = scalar_lea.vmem [#allocation2], 128
    %v1327 = vld [vmem:[%s1326] sm:$0xff]
    %v1328 = vld [vmem:[%s1326 + $0x8] sm:$0xff]
    %v1329 = vld [vmem:[%s1326 + $0x10] sm:$0xff]
    %v1330 = vld [vmem:[%s1326 + $0x18] sm:$0xff]
    %v1331 = vld [vmem:[#allocation10] sm:$0xff]
    %v1332 = vld [vmem:[#allocation10 + $0x8] sm:$0xff]
    %v1333 = vld [vmem:[#allocation10 + $0x10] sm:$0xff]
    %v1334 = vld [vmem:[#allocation10 + $0x18] sm:$0xff]
    %v1335 = vld [vmem:[#allocation10 + $0x20] sm:$0xff]
    %v1336 = vld [vmem:[#allocation10 + $0x28] sm:$0xff]
    %v1337 = vld [vmem:[#allocation10 + $0x30] sm:$0xff]
    %v1338 = vld [vmem:[#allocation10 + $0x38] sm:$0xff]
    %v1339 = vld [vmem:[#allocation10 + $0x40] sm:$0xff]
    %v1340 = vld [vmem:[#allocation10 + $0x48] sm:$0xff]
    %v1341 = vld [vmem:[#allocation10 + $0x50] sm:$0xff]
    %v1342 = vld [vmem:[#allocation10 + $0x58] sm:$0xff]
    %v1343 = vld [vmem:[#allocation10 + $0x60] sm:$0xff]
    %v1344 = vld [vmem:[#allocation10 + $0x68] sm:$0xff]
    %v1345 = vld [vmem:[#allocation10 + $0x70] sm:$0xff]
    %v1346 = vld [vmem:[#allocation10 + $0x78] sm:$0xff]
    %v1347 = vld [vmem:[#allocation10 + $0x80] sm:$0xff]
    %v1348 = vld [vmem:[#allocation10 + $0x88] sm:$0xff]
    %v1349 = vld [vmem:[#allocation10 + $0x90] sm:$0xff]
    %v1350 = vld [vmem:[#allocation10 + $0x98] sm:$0xff]
    %v1351 = vld [vmem:[#allocation10 + $0xa0] sm:$0xff]
    %v1352 = vld [vmem:[#allocation10 + $0xa8] sm:$0xff]
    %v1353 = vld [vmem:[#allocation10 + $0xb0] sm:$0xff]
    %v1354 = vld [vmem:[#allocation10 + $0xb8] sm:$0xff]
    %v1355 = vld [vmem:[#allocation10 + $0xc0] sm:$0xff]
    %v1356 = vld [vmem:[#allocation10 + $0xc8] sm:$0xff]
    %v1357 = vld [vmem:[#allocation10 + $0xd0] sm:$0xff]
    %v1358 = vld [vmem:[#allocation10 + $0xd8] sm:$0xff]
    %v1359 = vld [vmem:[#allocation10 + $0xe0] sm:$0xff]
    %v1360 = vld [vmem:[#allocation10 + $0xe8] sm:$0xff]
    %v1361 = vld [vmem:[#allocation10 + $0xf0] sm:$0xff]
    %v1362 = vld [vmem:[#allocation10 + $0xf8] sm:$0xff]
    %v1363 = vld [vmem:[#allocation10 + $0x100] sm:$0xff]
    %v1364 = vld [vmem:[#allocation10 + $0x108] sm:$0xff]
    %v1365 = vld [vmem:[#allocation10 + $0x110] sm:$0xff]
    %v1366 = vld [vmem:[#allocation10 + $0x118] sm:$0xff]
    %v1367 = vld [vmem:[#allocation10 + $0x120] sm:$0xff]
    %v1368 = vld [vmem:[#allocation10 + $0x128] sm:$0xff]
    %v1369 = vld [vmem:[#allocation10 + $0x130] sm:$0xff]
    %v1370 = vld [vmem:[#allocation10 + $0x138] sm:$0xff]
    %v1371 = vld [vmem:[#allocation10 + $0x140] sm:$0xff]
    %v1372 = vld [vmem:[#allocation10 + $0x148] sm:$0xff]
    %v1373 = vld [vmem:[#allocation10 + $0x150] sm:$0xff]
    %v1374 = vld [vmem:[#allocation10 + $0x158] sm:$0xff]
    %v1375 = vld [vmem:[#allocation10 + $0x160] sm:$0xff]
    %v1376 = vld [vmem:[#allocation10 + $0x168] sm:$0xff]
    %v1377 = vld [vmem:[#allocation10 + $0x170] sm:$0xff]
    %v1378 = vld [vmem:[#allocation10 + $0x178] sm:$0xff]
    %v1379 = vld [vmem:[#allocation10 + $0x180] sm:$0xff]
    %v1380 = vld [vmem:[#allocation10 + $0x188] sm:$0xff]
    %v1381 = vld [vmem:[#allocation10 + $0x190] sm:$0xff]
    %v1382 = vld [vmem:[#allocation10 + $0x198] sm:$0xff]
    %v1383 = vld [vmem:[#allocation10 + $0x1a0] sm:$0xff]
    %v1384 = vld [vmem:[#allocation10 + $0x1a8] sm:$0xff]
    %v1385 = vld [vmem:[#allocation10 + $0x1b0] sm:$0xff]
    %v1386 = vld [vmem:[#allocation10 + $0x1b8] sm:$0xff]
    %v1387 = vld [vmem:[#allocation10 + $0x1c0] sm:$0xff]
    %v1388 = vld [vmem:[#allocation10 + $0x1c8] sm:$0xff]
    %v1389 = vld [vmem:[#allocation10 + $0x1d0] sm:$0xff]
    %v1390 = vld [vmem:[#allocation10 + $0x1d8] sm:$0xff]
    %v1391 = vld [vmem:[#allocation10 + $0x1e0] sm:$0xff]
    %v1392 = vld [vmem:[#allocation10 + $0x1e8] sm:$0xff]
    %v1393 = vld [vmem:[#allocation10 + $0x1f0] sm:$0xff]
    %v1394 = vld [vmem:[#allocation10 + $0x1f8] sm:$0xff]
    %1395 = vmatprep.subr.mxu0 %v1332
    %1396 = vmatpush1.msra.mxu0 %v1331
    %1397 = vmatprep.subr.mxu0 %v1336
    %1398 = vmatpush1.msra.mxu0 %v1335
    %1399 = vmatprep.subr.mxu0 %v1340
    %1400 = vmatpush1.msra.mxu0 %v1339
    %1401 = vmatprep.subr.mxu0 %v1344
    %1402 = vmatpush1.msra.mxu0 %v1343
    %1403 = vmatprep.subr.mxu0 %v1348
    %1404 = vmatpush1.msra.mxu0 %v1347
    %1405 = vmatprep.subr.mxu0 %v1352
    %1406 = vmatpush1.msra.mxu0 %v1351
    %1407 = vmatprep.subr.mxu0 %v1356
    %1408 = vmatpush1.msra.mxu0 %v1355
    %1409 = vmatprep.subr.mxu0 %v1360
    %1410 = vmatpush1.msra.mxu0 %v1359
    %1411 = vmatprep.subr.mxu0 %v1364
    %1412 = vmatpush1.msra.mxu0 %v1363
    %1413 = vmatprep.subr.mxu0 %v1368
    %1414 = vmatpush1.msra.mxu0 %v1367
    %1415 = vmatprep.subr.mxu0 %v1372
    %1416 = vmatpush1.msra.mxu0 %v1371
    %1417 = vmatprep.subr.mxu0 %v1376
    %1418 = vmatpush1.msra.mxu0 %v1375
    %1419 = vmatprep.subr.mxu0 %v1380
    %1420 = vmatpush1.msra.mxu0 %v1379
    %1421 = vmatprep.subr.mxu0 %v1384
    %1422 = vmatpush1.msra.mxu0 %v1383
    %1423 = vmatprep.subr.mxu0 %v1388
    %1424 = vmatpush1.msra.mxu0 %v1387
    %1425 = vmatprep.subr.mxu0 %v1392
    %1426 = vmatpush1.msra.mxu0 %v1391
    %1427 = vmatprep.subr.mxu0 0.0
    %1428 = vmatpush1.msra.mxu0 0.0
    %1429 = vmatprep.subr.mxu0 0.0
    %1430 = vmatpush1.msra.mxu0 0.0
    %1431 = vmatprep.subr.mxu0 0.0
    %1432 = vmatpush1.msra.mxu0 0.0
    %1433 = vmatprep.subr.mxu0 0.0
    %1434 = vmatpush1.msra.mxu0 0.0
    %1435 = vmatprep.subr.mxu0 0.0
    %1436 = vmatpush1.msra.mxu0 0.0
    %1437 = vmatprep.subr.mxu0 0.0
    %1438 = vmatpush1.msra.mxu0 0.0
    %1439 = vmatprep.subr.mxu0 0.0
    %1440 = vmatpush1.msra.mxu0 0.0
    %1441 = vmatprep.subr.mxu0 0.0
    %1442 = vmatpush1.msra.mxu0 0.0
    %1443 = vmatprep.subr.mxu0 0.0
    %1444 = vmatpush1.msra.mxu0 0.0
    %1445 = vmatprep.subr.mxu0 0.0
    %1446 = vmatpush1.msra.mxu0 0.0
    %1447 = vmatprep.subr.mxu0 0.0
    %1448 = vmatpush1.msra.mxu0 0.0
    %1449 = vmatprep.subr.mxu0 0.0
    %1450 = vmatpush1.msra.mxu0 0.0
    %1451 = vmatprep.subr.mxu0 0.0
    %1452 = vmatpush1.msra.mxu0 0.0
    %1453 = vmatprep.subr.mxu0 0.0
    %1454 = vmatpush1.msra.mxu0 0.0
    %1455 = vmatprep.subr.mxu0 0.0
    %1456 = vmatpush1.msra.mxu0 0.0
    %1457 = vmatprep.subr.mxu0 0.0
    %1458 = vmatpush1.msra.mxu0 0.0
    %1459 = vmatprep.mubr.f32.mxu0 0.0
    %1460 = vmatmul.mubr.f32.gmra.mrb[0].mxu0 %v1323
    %v1461 = vpop.f32.mrb[0].mxu0
    %v1462 = vadd.f32 0.0, %v1461
    %v1463 = vpop.f32.mrb[0].mxu0
    %v1464 = vadd.f32 0.0, %v1463
    %1465 = vdwg.mxu0
    %1466 = vmatprep.subr.mxu0 %v1334
    %1467 = vmatpush1.msra.mxu0 %v1333
    %1468 = vmatprep.subr.mxu0 %v1338
    %1469 = vmatpush1.msra.mxu0 %v1337
    %1470 = vmatprep.subr.mxu0 %v1342
    %1471 = vmatpush1.msra.mxu0 %v1341
    %1472 = vmatprep.subr.mxu0 %v1346
    %1473 = vmatpush1.msra.mxu0 %v1345
    %1474 = vmatprep.subr.mxu0 %v1350
    %1475 = vmatpush1.msra.mxu0 %v1349
    %1476 = vmatprep.subr.mxu0 %v1354
    %1477 = vmatpush1.msra.mxu0 %v1353
    %1478 = vmatprep.subr.mxu0 %v1358
    %1479 = vmatpush1.msra.mxu0 %v1357
    %1480 = vmatprep.subr.mxu0 %v1362
    %1481 = vmatpush1.msra.mxu0 %v1361
    %1482 = vmatprep.subr.mxu0 %v1366
    %1483 = vmatpush1.msra.mxu0 %v1365
    %1484 = vmatprep.subr.mxu0 %v1370
    %1485 = vmatpush1.msra.mxu0 %v1369
    %1486 = vmatprep.subr.mxu0 %v1374
    %1487 = vmatpush1.msra.mxu0 %v1373
    %1488 = vmatprep.subr.mxu0 %v1378
    %1489 = vmatpush1.msra.mxu0 %v1377
    %1490 = vmatprep.subr.mxu0 %v1382
    %1491 = vmatpush1.msra.mxu0 %v1381
    %1492 = vmatprep.subr.mxu0 %v1386
    %1493 = vmatpush1.msra.mxu0 %v1385
    %1494 = vmatprep.subr.mxu0 %v1390
    %1495 = vmatpush1.msra.mxu0 %v1389
    %1496 = vmatprep.subr.mxu0 %v1394
    %1497 = vmatpush1.msra.mxu0 %v1393
    %1498 = vmatprep.subr.mxu0 0.0
    %1499 = vmatpush1.msra.mxu0 0.0
    %1500 = vmatprep.subr.mxu0 0.0
    %1501 = vmatpush1.msra.mxu0 0.0
    %1502 = vmatprep.subr.mxu0 0.0
    %1503 = vmatpush1.msra.mxu0 0.0
    %1504 = vmatprep.subr.mxu0 0.0
    %1505 = vmatpush1.msra.mxu0 0.0
    %1506 = vmatprep.subr.mxu0 0.0
    %1507 = vmatpush1.msra.mxu0 0.0
    %1508 = vmatprep.subr.mxu0 0.0
    %1509 = vmatpush1.msra.mxu0 0.0
    %1510 = vmatprep.subr.mxu0 0.0
    %1511 = vmatpush1.msra.mxu0 0.0
    %1512 = vmatprep.subr.mxu0 0.0
    %1513 = vmatpush1.msra.mxu0 0.0
    %1514 = vmatprep.subr.mxu0 0.0
    %1515 = vmatpush1.msra.mxu0 0.0
    %1516 = vmatprep.subr.mxu0 0.0
    %1517 = vmatpush1.msra.mxu0 0.0
    %1518 = vmatprep.subr.mxu0 0.0
    %1519 = vmatpush1.msra.mxu0 0.0
    %1520 = vmatprep.subr.mxu0 0.0
    %1521 = vmatpush1.msra.mxu0 0.0
    %1522 = vmatprep.subr.mxu0 0.0
    %1523 = vmatpush1.msra.mxu0 0.0
    %1524 = vmatprep.subr.mxu0 0.0
    %1525 = vmatpush1.msra.mxu0 0.0
    %1526 = vmatprep.subr.mxu0 0.0
    %1527 = vmatpush1.msra.mxu0 0.0
    %1528 = vmatprep.subr.mxu0 0.0
    %1529 = vmatpush1.msra.mxu0 0.0
    %1530 = vmatprep.mubr.f32.mxu0 0.0
    %1531 = vmatmul.mubr.f32.gmra.mrb[0].mxu0 %v1323
    %v1532 = vpop.f32.mrb[0].mxu0
    %v1533 = vadd.f32 0.0, %v1532
    %v1534 = vpop.f32.mrb[0].mxu0
    %v1535 = vadd.f32 0.0, %v1534
    %1536 = vdwg.mxu0
    %v1537 = vadd.f32 %v1327, %v1462
    %v1538 = vadd.f32 %v1328, %v1464
    %v1539 = vadd.f32 %v1329, %v1533
    %v1540 = vadd.f32 %v1330, %v1535
    %v1541 = vmul.f32 %v1537, 0.5
    %v1542 = vmul.f32 %v1538, 0.5
    %v1543 = vmul.f32 %v1539, 0.5
    %v1544 = vtanh.pop %v1541
    %v1545 = vtanh.pop %v1542
    %v1546 = vtanh.pop %v1543
    %v1547 = vmul.f32 %v1544, 0.5
    %v1548 = vmul.f32 %v1545, 0.5
    %v1549 = vmul.f32 %v1546, 0.5
    %v1550 = vadd.f32 %v1547, 0.5
    %v1551 = vadd.f32 %v1548, 0.5
    %v1552 = vadd.f32 %v1549, 0.5
    %v1553 = vtanh.pop %v1540
    %v1554 = vmul.f32 %v1551, %v1321
    %v1555 = vmul.f32 %v1550, %v1553
    %v1556 = vadd.f32 %v1554, %v1555
    %v1557 = vtanh.pop %v1556
    %v1558 = vmul.f32 %v1552, %v1557
    %s1559 = scalar_lea.vmem [#allocation11], 32
    %1560 = vst [vmem:[%s1559] sm:$0xff] %v1558
    %s1561 = scalar_lea.vmem [#allocation2], 160
    %v1562 = vld [vmem:[%s1561] sm:$0xff]
    %v1563 = vld [vmem:[%s1561 + $0x8] sm:$0xff]
    %v1564 = vld [vmem:[%s1561 + $0x10] sm:$0xff]
    %v1565 = vld [vmem:[%s1561 + $0x18] sm:$0xff]
    %v1566 = vld [vmem:[#allocation10] sm:$0xff]
    %v1567 = vld [vmem:[#allocation10 + $0x8] sm:$0xff]
    %v1568 = vld [vmem:[#allocation10 + $0x10] sm:$0xff]
    %v1569 = vld [vmem:[#allocation10 + $0x18] sm:$0xff]
    %v1570 = vld [vmem:[#allocation10 + $0x20] sm:$0xff]
    %v1571 = vld [vmem:[#allocation10 + $0x28] sm:$0xff]
    %v1572 = vld [vmem:[#allocation10 + $0x30] sm:$0xff]
    %v1573 = vld [vmem:[#allocation10 + $0x38] sm:$0xff]
    %v1574 = vld [vmem:[#allocation10 + $0x40] sm:$0xff]
    %v1575 = vld [vmem:[#allocation10 + $0x48] sm:$0xff]
    %v1576 = vld [vmem:[#allocation10 + $0x50] sm:$0xff]
    %v1577 = vld [vmem:[#allocation10 + $0x58] sm:$0xff]
    %v1578 = vld [vmem:[#allocation10 + $0x60] sm:$0xff]
    %v1579 = vld [vmem:[#allocation10 + $0x68] sm:$0xff]
    %v1580 = vld [vmem:[#allocation10 + $0x70] sm:$0xff]
    %v1581 = vld [vmem:[#allocation10 + $0x78] sm:$0xff]
    %v1582 = vld [vmem:[#allocation10 + $0x80] sm:$0xff]
    %v1583 = vld [vmem:[#allocation10 + $0x88] sm:$0xff]
    %v1584 = vld [vmem:[#allocation10 + $0x90] sm:$0xff]
    %v1585 = vld [vmem:[#allocation10 + $0x98] sm:$0xff]
    %v1586 = vld [vmem:[#allocation10 + $0xa0] sm:$0xff]
    %v1587 = vld [vmem:[#allocation10 + $0xa8] sm:$0xff]
    %v1588 = vld [vmem:[#allocation10 + $0xb0] sm:$0xff]
    %v1589 = vld [vmem:[#allocation10 + $0xb8] sm:$0xff]
    %v1590 = vld [vmem:[#allocation10 + $0xc0] sm:$0xff]
    %v1591 = vld [vmem:[#allocation10 + $0xc8] sm:$0xff]
    %v1592 = vld [vmem:[#allocation10 + $0xd0] sm:$0xff]
    %v1593 = vld [vmem:[#allocation10 + $0xd8] sm:$0xff]
    %v1594 = vld [vmem:[#allocation10 + $0xe0] sm:$0xff]
    %v1595 = vld [vmem:[#allocation10 + $0xe8] sm:$0xff]
    %v1596 = vld [vmem:[#allocation10 + $0xf0] sm:$0xff]
    %v1597 = vld [vmem:[#allocation10 + $0xf8] sm:$0xff]
    %v1598 = vld [vmem:[#allocation10 + $0x100] sm:$0xff]
    %v1599 = vld [vmem:[#allocation10 + $0x108] sm:$0xff]
    %v1600 = vld [vmem:[#allocation10 + $0x110] sm:$0xff]
    %v1601 = vld [vmem:[#allocation10 + $0x118] sm:$0xff]
    %v1602 = vld [vmem:[#allocation10 + $0x120] sm:$0xff]
    %v1603 = vld [vmem:[#allocation10 + $0x128] sm:$0xff]
    %v1604 = vld [vmem:[#allocation10 + $0x130] sm:$0xff]
    %v1605 = vld [vmem:[#allocation10 + $0x138] sm:$0xff]
    %v1606 = vld [vmem:[#allocation10 + $0x140] sm:$0xff]
    %v1607 = vld [vmem:[#allocation10 + $0x148] sm:$0xff]
    %v1608 = vld [vmem:[#allocation10 + $0x150] sm:$0xff]
    %v1609 = vld [vmem:[#allocation10 + $0x158] sm:$0xff]
    %v1610 = vld [vmem:[#allocation10 + $0x160] sm:$0xff]
    %v1611 = vld [vmem:[#allocation10 + $0x168] sm:$0xff]
    %v1612 = vld [vmem:[#allocation10 + $0x170] sm:$0xff]
    %v1613 = vld [vmem:[#allocation10 + $0x178] sm:$0xff]
    %v1614 = vld [vmem:[#allocation10 + $0x180] sm:$0xff]
    %v1615 = vld [vmem:[#allocation10 + $0x188] sm:$0xff]
    %v1616 = vld [vmem:[#allocation10 + $0x190] sm:$0xff]
    %v1617 = vld [vmem:[#allocation10 + $0x198] sm:$0xff]
    %v1618 = vld [vmem:[#allocation10 + $0x1a0] sm:$0xff]
    %v1619 = vld [vmem:[#allocation10 + $0x1a8] sm:$0xff]
    %v1620 = vld [vmem:[#allocation10 + $0x1b0] sm:$0xff]
    %v1621 = vld [vmem:[#allocation10 + $0x1b8] sm:$0xff]
    %v1622 = vld [vmem:[#allocation10 + $0x1c0] sm:$0xff]
    %v1623 = vld [vmem:[#allocation10 + $0x1c8] sm:$0xff]
    %v1624 = vld [vmem:[#allocation10 + $0x1d0] sm:$0xff]
    %v1625 = vld [vmem:[#allocation10 + $0x1d8] sm:$0xff]
    %v1626 = vld [vmem:[#allocation10 + $0x1e0] sm:$0xff]
    %v1627 = vld [vmem:[#allocation10 + $0x1e8] sm:$0xff]
    %v1628 = vld [vmem:[#allocation10 + $0x1f0] sm:$0xff]
    %v1629 = vld [vmem:[#allocation10 + $0x1f8] sm:$0xff]
    %1630 = vmatprep.subr.mxu0 %v1567
    %1631 = vmatpush1.msra.mxu0 %v1566
    %1632 = vmatprep.subr.mxu0 %v1571
    %1633 = vmatpush1.msra.mxu0 %v1570
    %1634 = vmatprep.subr.mxu0 %v1575
    %1635 = vmatpush1.msra.mxu0 %v1574
    %1636 = vmatprep.subr.mxu0 %v1579
    %1637 = vmatpush1.msra.mxu0 %v1578
    %1638 = vmatprep.subr.mxu0 %v1583
    %1639 = vmatpush1.msra.mxu0 %v1582
    %1640 = vmatprep.subr.mxu0 %v1587
    %1641 = vmatpush1.msra.mxu0 %v1586
    %1642 = vmatprep.subr.mxu0 %v1591
    %1643 = vmatpush1.msra.mxu0 %v1590
    %1644 = vmatprep.subr.mxu0 %v1595
    %1645 = vmatpush1.msra.mxu0 %v1594
    %1646 = vmatprep.subr.mxu0 %v1599
    %1647 = vmatpush1.msra.mxu0 %v1598
    %1648 = vmatprep.subr.mxu0 %v1603
    %1649 = vmatpush1.msra.mxu0 %v1602
    %1650 = vmatprep.subr.mxu0 %v1607
    %1651 = vmatpush1.msra.mxu0 %v1606
    %1652 = vmatprep.subr.mxu0 %v1611
    %1653 = vmatpush1.msra.mxu0 %v1610
    %1654 = vmatprep.subr.mxu0 %v1615
    %1655 = vmatpush1.msra.mxu0 %v1614
    %1656 = vmatprep.subr.mxu0 %v1619
    %1657 = vmatpush1.msra.mxu0 %v1618
    %1658 = vmatprep.subr.mxu0 %v1623
    %1659 = vmatpush1.msra.mxu0 %v1622
    %1660 = vmatprep.subr.mxu0 %v1627
    %1661 = vmatpush1.msra.mxu0 %v1626
    %1662 = vmatprep.subr.mxu0 0.0
    %1663 = vmatpush1.msra.mxu0 0.0
    %1664 = vmatprep.subr.mxu0 0.0
    %1665 = vmatpush1.msra.mxu0 0.0
    %1666 = vmatprep.subr.mxu0 0.0
    %1667 = vmatpush1.msra.mxu0 0.0
    %1668 = vmatprep.subr.mxu0 0.0
    %1669 = vmatpush1.msra.mxu0 0.0
    %1670 = vmatprep.subr.mxu0 0.0
    %1671 = vmatpush1.msra.mxu0 0.0
    %1672 = vmatprep.subr.mxu0 0.0
    %1673 = vmatpush1.msra.mxu0 0.0
    %1674 = vmatprep.subr.mxu0 0.0
    %1675 = vmatpush1.msra.mxu0 0.0
    %1676 = vmatprep.subr.mxu0 0.0
    %1677 = vmatpush1.msra.mxu0 0.0
    %1678 = vmatprep.subr.mxu0 0.0
    %1679 = vmatpush1.msra.mxu0 0.0
    %1680 = vmatprep.subr.mxu0 0.0
    %1681 = vmatpush1.msra.mxu0 0.0
    %1682 = vmatprep.subr.mxu0 0.0
    %1683 = vmatpush1.msra.mxu0 0.0
    %1684 = vmatprep.subr.mxu0 0.0
    %1685 = vmatpush1.msra.mxu0 0.0
    %1686 = vmatprep.subr.mxu0 0.0
    %1687 = vmatpush1.msra.mxu0 0.0
    %1688 = vmatprep.subr.mxu0 0.0
    %1689 = vmatpush1.msra.mxu0 0.0
    %1690 = vmatprep.subr.mxu0 0.0
    %1691 = vmatpush1.msra.mxu0 0.0
    %1692 = vmatprep.subr.mxu0 0.0
    %1693 = vmatpush1.msra.mxu0 0.0
    %1694 = vmatprep.mubr.f32.mxu0 0.0
    %1695 = vmatmul.mubr.f32.gmra.mrb[0].mxu0 %v1558
    %v1696 = vpop.f32.mrb[0].mxu0
    %v1697 = vadd.f32 0.0, %v1696
    %v1698 = vpop.f32.mrb[0].mxu0
    %v1699 = vadd.f32 0.0, %v1698
    %1700 = vdwg.mxu0
    %1701 = vmatprep.subr.mxu0 %v1569
    %1702 = vmatpush1.msra.mxu0 %v1568
    %1703 = vmatprep.subr.mxu0 %v1573
    %1704 = vmatpush1.msra.mxu0 %v1572
    %1705 = vmatprep.subr.mxu0 %v1577
    %1706 = vmatpush1.msra.mxu0 %v1576
    %1707 = vmatprep.subr.mxu0 %v1581
    %1708 = vmatpush1.msra.mxu0 %v1580
    %1709 = vmatprep.subr.mxu0 %v1585
    %1710 = vmatpush1.msra.mxu0 %v1584
    %1711 = vmatprep.subr.mxu0 %v1589
    %1712 = vmatpush1.msra.mxu0 %v1588
    %1713 = vmatprep.subr.mxu0 %v1593
    %1714 = vmatpush1.msra.mxu0 %v1592
    %1715 = vmatprep.subr.mxu0 %v1597
    %1716 = vmatpush1.msra.mxu0 %v1596
    %1717 = vmatprep.subr.mxu0 %v1601
    %1718 = vmatpush1.msra.mxu0 %v1600
    %1719 = vmatprep.subr.mxu0 %v1605
    %1720 = vmatpush1.msra.mxu0 %v1604
    %1721 = vmatprep.subr.mxu0 %v1609
    %1722 = vmatpush1.msra.mxu0 %v1608
    %1723 = vmatprep.subr.mxu0 %v1613
    %1724 = vmatpush1.msra.mxu0 %v1612
    %1725 = vmatprep.subr.mxu0 %v1617
    %1726 = vmatpush1.msra.mxu0 %v1616
    %1727 = vmatprep.subr.mxu0 %v1621
    %1728 = vmatpush1.msra.mxu0 %v1620
    %1729 = vmatprep.subr.mxu0 %v1625
    %1730 = vmatpush1.msra.mxu0 %v1624
    %1731 = vmatprep.subr.mxu0 %v1629
    %1732 = vmatpush1.msra.mxu0 %v1628
    %1733 = vmatprep.subr.mxu0 0.0
    %1734 = vmatpush1.msra.mxu0 0.0
    %1735 = vmatprep.subr.mxu0 0.0
    %1736 = vmatpush1.msra.mxu0 0.0
    %1737 = vmatprep.subr.mxu0 0.0
    %1738 = vmatpush1.msra.mxu0 0.0
    %1739 = vmatprep.subr.mxu0 0.0
    %1740 = vmatpush1.msra.mxu0 0.0
    %1741 = vmatprep.subr.mxu0 0.0
    %1742 = vmatpush1.msra.mxu0 0.0
    %1743 = vmatprep.subr.mxu0 0.0
    %1744 = vmatpush1.msra.mxu0 0.0
    %1745 = vmatprep.subr.mxu0 0.0
    %1746 = vmatpush1.msra.mxu0 0.0
    %1747 = vmatprep.subr.mxu0 0.0
    %1748 = vmatpush1.msra.mxu0 0.0
    %1749 = vmatprep.subr.mxu0 0.0
    %1750 = vmatpush1.msra.mxu0 0.0
    %1751 = vmatprep.subr.mxu0 0.0
    %1752 = vmatpush1.msra.mxu0 0.0
    %1753 = vmatprep.subr.mxu0 0.0
    %1754 = vmatpush1.msra.mxu0 0.0
    %1755 = vmatprep.subr.mxu0 0.0
    %1756 = vmatpush1.msra.mxu0 0.0
    %1757 = vmatprep.subr.mxu0 0.0
    %1758 = vmatpush1.msra.mxu0 0.0
    %1759 = vmatprep.subr.mxu0 0.0
    %1760 = vmatpush1.msra.mxu0 0.0
    %1761 = vmatprep.subr.mxu0 0.0
    %1762 = vmatpush1.msra.mxu0 0.0
    %1763 = vmatprep.subr.mxu0 0.0
    %1764 = vmatpush1.msra.mxu0 0.0
    %1765 = vmatprep.mubr.f32.mxu0 0.0
    %1766 = vmatmul.mubr.f32.gmra.mrb[0].mxu0 %v1558
    %v1767 = vpop.f32.mrb[0].mxu0
    %v1768 = vadd.f32 0.0, %v1767
    %v1769 = vpop.f32.mrb[0].mxu0
    %v1770 = vadd.f32 0.0, %v1769
    %1771 = vdwg.mxu0
    %v1772 = vadd.f32 %v1562, %v1697
    %v1773 = vadd.f32 %v1563, %v1699
    %v1774 = vadd.f32 %v1564, %v1768
    %v1775 = vadd.f32 %v1565, %v1770
    %v1776 = vmul.f32 %v1772, 0.5
    %v1777 = vmul.f32 %v1773, 0.5
    %v1778 = vmul.f32 %v1774, 0.5
    %v1779 = vtanh.pop %v1776
    %v1780 = vtanh.pop %v1777
    %v1781 = vtanh.pop %v1778
    %v1782 = vmul.f32 %v1779, 0.5
    %v1783 = vmul.f32 %v1780, 0.5
    %v1784 = vmul.f32 %v1781, 0.5
    %v1785 = vadd.f32 %v1782, 0.5
    %v1786 = vadd.f32 %v1783, 0.5
    %v1787 = vadd.f32 %v1784, 0.5
    %v1788 = vtanh.pop %v1775
    %v1789 = vmul.f32 %v1786, %v1556
    %v1790 = vmul.f32 %v1785, %v1788
    %v1791 = vadd.f32 %v1789, %v1790
    %v1792 = vtanh.pop %v1791
    %v1793 = vmul.f32 %v1787, %v1792
    %s1794 = scalar_lea.vmem [#allocation11], 40
    %1795 = vst [vmem:[%s1794] sm:$0xff] %v1793
    %s1796 = scalar_lea.vmem [#allocation2], 192
    %v1797 = vld [vmem:[%s1796] sm:$0xff]
    %v1798 = vld [vmem:[%s1796 + $0x8] sm:$0xff]
    %v1799 = vld [vmem:[%s1796 + $0x10] sm:$0xff]
    %v1800 = vld [vmem:[%s1796 + $0x18] sm:$0xff]
    %v1801 = vld [vmem:[#allocation10] sm:$0xff]
    %v1802 = vld [vmem:[#allocation10 + $0x8] sm:$0xff]
    %v1803 = vld [vmem:[#allocation10 + $0x10] sm:$0xff]
    %v1804 = vld [vmem:[#allocation10 + $0x18] sm:$0xff]
    %v1805 = vld [vmem:[#allocation10 + $0x20] sm:$0xff]
    %v1806 = vld [vmem:[#allocation10 + $0x28] sm:$0xff]
    %v1807 = vld [vmem:[#allocation10 + $0x30] sm:$0xff]
    %v1808 = vld [vmem:[#allocation10 + $0x38] sm:$0xff]
    %v1809 = vld [vmem:[#allocation10 + $0x40] sm:$0xff]
    %v1810 = vld [vmem:[#allocation10 + $0x48] sm:$0xff]
    %v1811 = vld [vmem:[#allocation10 + $0x50] sm:$0xff]
    %v1812 = vld [vmem:[#allocation10 + $0x58] sm:$0xff]
    %v1813 = vld [vmem:[#allocation10 + $0x60] sm:$0xff]
    %v1814 = vld [vmem:[#allocation10 + $0x68] sm:$0xff]
    %v1815 = vld [vmem:[#allocation10 + $0x70] sm:$0xff]
    %v1816 = vld [vmem:[#allocation10 + $0x78] sm:$0xff]
    %v1817 = vld [vmem:[#allocation10 + $0x80] sm:$0xff]
    %v1818 = vld [vmem:[#allocation10 + $0x88] sm:$0xff]
    %v1819 = vld [vmem:[#allocation10 + $0x90] sm:$0xff]
    %v1820 = vld [vmem:[#allocation10 + $0x98] sm:$0xff]
    %v1821 = vld [vmem:[#allocation10 + $0xa0] sm:$0xff]
    %v1822 = vld [vmem:[#allocation10 + $0xa8] sm:$0xff]
    %v1823 = vld [vmem:[#allocation10 + $0xb0] sm:$0xff]
    %v1824 = vld [vmem:[#allocation10 + $0xb8] sm:$0xff]
    %v1825 = vld [vmem:[#allocation10 + $0xc0] sm:$0xff]
    %v1826 = vld [vmem:[#allocation10 + $0xc8] sm:$0xff]
    %v1827 = vld [vmem:[#allocation10 + $0xd0] sm:$0xff]
    %v1828 = vld [vmem:[#allocation10 + $0xd8] sm:$0xff]
    %v1829 = vld [vmem:[#allocation10 + $0xe0] sm:$0xff]
    %v1830 = vld [vmem:[#allocation10 + $0xe8] sm:$0xff]
    %v1831 = vld [vmem:[#allocation10 + $0xf0] sm:$0xff]
    %v1832 = vld [vmem:[#allocation10 + $0xf8] sm:$0xff]
    %v1833 = vld [vmem:[#allocation10 + $0x100] sm:$0xff]
    %v1834 = vld [vmem:[#allocation10 + $0x108] sm:$0xff]
    %v1835 = vld [vmem:[#allocation10 + $0x110] sm:$0xff]
    %v1836 = vld [vmem:[#allocation10 + $0x118] sm:$0xff]
    %v1837 = vld [vmem:[#allocation10 + $0x120] sm:$0xff]
    %v1838 = vld [vmem:[#allocation10 + $0x128] sm:$0xff]
    %v1839 = vld [vmem:[#allocation10 + $0x130] sm:$0xff]
    %v1840 = vld [vmem:[#allocation10 + $0x138] sm:$0xff]
    %v1841 = vld [vmem:[#allocation10 + $0x140] sm:$0xff]
    %v1842 = vld [vmem:[#allocation10 + $0x148] sm:$0xff]
    %v1843 = vld [vmem:[#allocation10 + $0x150] sm:$0xff]
    %v1844 = vld [vmem:[#allocation10 + $0x158] sm:$0xff]
    %v1845 = vld [vmem:[#allocation10 + $0x160] sm:$0xff]
    %v1846 = vld [vmem:[#allocation10 + $0x168] sm:$0xff]
    %v1847 = vld [vmem:[#allocation10 + $0x170] sm:$0xff]
    %v1848 = vld [vmem:[#allocation10 + $0x178] sm:$0xff]
    %v1849 = vld [vmem:[#allocation10 + $0x180] sm:$0xff]
    %v1850 = vld [vmem:[#allocation10 + $0x188] sm:$0xff]
    %v1851 = vld [vmem:[#allocation10 + $0x190] sm:$0xff]
    %v1852 = vld [vmem:[#allocation10 + $0x198] sm:$0xff]
    %v1853 = vld [vmem:[#allocation10 + $0x1a0] sm:$0xff]
    %v1854 = vld [vmem:[#allocation10 + $0x1a8] sm:$0xff]
    %v1855 = vld [vmem:[#allocation10 + $0x1b0] sm:$0xff]
    %v1856 = vld [vmem:[#allocation10 + $0x1b8] sm:$0xff]
    %v1857 = vld [vmem:[#allocation10 + $0x1c0] sm:$0xff]
    %v1858 = vld [vmem:[#allocation10 + $0x1c8] sm:$0xff]
    %v1859 = vld [vmem:[#allocation10 + $0x1d0] sm:$0xff]
    %v1860 = vld [vmem:[#allocation10 + $0x1d8] sm:$0xff]
    %v1861 = vld [vmem:[#allocation10 + $0x1e0] sm:$0xff]
    %v1862 = vld [vmem:[#allocation10 + $0x1e8] sm:$0xff]
    %v1863 = vld [vmem:[#allocation10 + $0x1f0] sm:$0xff]
    %v1864 = vld [vmem:[#allocation10 + $0x1f8] sm:$0xff]
    %1865 = vmatprep.subr.mxu0 %v1802
    %1866 = vmatpush1.msra.mxu0 %v1801
    %1867 = vmatprep.subr.mxu0 %v1806
    %1868 = vmatpush1.msra.mxu0 %v1805
    %1869 = vmatprep.subr.mxu0 %v1810
    %1870 = vmatpush1.msra.mxu0 %v1809
    %1871 = vmatprep.subr.mxu0 %v1814
    %1872 = vmatpush1.msra.mxu0 %v1813
    %1873 = vmatprep.subr.mxu0 %v1818
    %1874 = vmatpush1.msra.mxu0 %v1817
    %1875 = vmatprep.subr.mxu0 %v1822
    %1876 = vmatpush1.msra.mxu0 %v1821
    %1877 = vmatprep.subr.mxu0 %v1826
    %1878 = vmatpush1.msra.mxu0 %v1825
    %1879 = vmatprep.subr.mxu0 %v1830
    %1880 = vmatpush1.msra.mxu0 %v1829
    %1881 = vmatprep.subr.mxu0 %v1834
    %1882 = vmatpush1.msra.mxu0 %v1833
    %1883 = vmatprep.subr.mxu0 %v1838
    %1884 = vmatpush1.msra.mxu0 %v1837
    %1885 = vmatprep.subr.mxu0 %v1842
    %1886 = vmatpush1.msra.mxu0 %v1841
    %1887 = vmatprep.subr.mxu0 %v1846
    %1888 = vmatpush1.msra.mxu0 %v1845
    %1889 = vmatprep.subr.mxu0 %v1850
    %1890 = vmatpush1.msra.mxu0 %v1849
    %1891 = vmatprep.subr.mxu0 %v1854
    %1892 = vmatpush1.msra.mxu0 %v1853
    %1893 = vmatprep.subr.mxu0 %v1858
    %1894 = vmatpush1.msra.mxu0 %v1857
    %1895 = vmatprep.subr.mxu0 %v1862
    %1896 = vmatpush1.msra.mxu0 %v1861
    %1897 = vmatprep.subr.mxu0 0.0
    %1898 = vmatpush1.msra.mxu0 0.0
    %1899 = vmatprep.subr.mxu0 0.0
    %1900 = vmatpush1.msra.mxu0 0.0
    %1901 = vmatprep.subr.mxu0 0.0
    %1902 = vmatpush1.msra.mxu0 0.0
    %1903 = vmatprep.subr.mxu0 0.0
    %1904 = vmatpush1.msra.mxu0 0.0
    %1905 = vmatprep.subr.mxu0 0.0
    %1906 = vmatpush1.msra.mxu0 0.0
    %1907 = vmatprep.subr.mxu0 0.0
    %1908 = vmatpush1.msra.mxu0 0.0
    %1909 = vmatprep.subr.mxu0 0.0
    %1910 = vmatpush1.msra.mxu0 0.0
    %1911 = vmatprep.subr.mxu0 0.0
    %1912 = vmatpush1.msra.mxu0 0.0
    %1913 = vmatprep.subr.mxu0 0.0
    %1914 = vmatpush1.msra.mxu0 0.0
    %1915 = vmatprep.subr.mxu0 0.0
    %1916 = vmatpush1.msra.mxu0 0.0
    %1917 = vmatprep.subr.mxu0 0.0
    %1918 = vmatpush1.msra.mxu0 0.0
    %1919 = vmatprep.subr.mxu0 0.0
    %1920 = vmatpush1.msra.mxu0 0.0
    %1921 = vmatprep.subr.mxu0 0.0
    %1922 = vmatpush1.msra.mxu0 0.0
    %1923 = vmatprep.subr.mxu0 0.0
    %1924 = vmatpush1.msra.mxu0 0.0
    %1925 = vmatprep.subr.mxu0 0.0
    %1926 = vmatpush1.msra.mxu0 0.0
    %1927 = vmatprep.subr.mxu0 0.0
    %1928 = vmatpush1.msra.mxu0 0.0
    %1929 = vmatprep.mubr.f32.mxu0 0.0
    %1930 = vmatmul.mubr.f32.gmra.mrb[0].mxu0 %v1793
    %v1931 = vpop.f32.mrb[0].mxu0
    %v1932 = vadd.f32 0.0, %v1931
    %v1933 = vpop.f32.mrb[0].mxu0
    %v1934 = vadd.f32 0.0, %v1933
    %1935 = vdwg.mxu0
    %1936 = vmatprep.subr.mxu0 %v1804
    %1937 = vmatpush1.msra.mxu0 %v1803
    %1938 = vmatprep.subr.mxu0 %v1808
    %1939 = vmatpush1.msra.mxu0 %v1807
    %1940 = vmatprep.subr.mxu0 %v1812
    %1941 = vmatpush1.msra.mxu0 %v1811
    %1942 = vmatprep.subr.mxu0 %v1816
    %1943 = vmatpush1.msra.mxu0 %v1815
    %1944 = vmatprep.subr.mxu0 %v1820
    %1945 = vmatpush1.msra.mxu0 %v1819
    %1946 = vmatprep.subr.mxu0 %v1824
    %1947 = vmatpush1.msra.mxu0 %v1823
    %1948 = vmatprep.subr.mxu0 %v1828
    %1949 = vmatpush1.msra.mxu0 %v1827
    %1950 = vmatprep.subr.mxu0 %v1832
    %1951 = vmatpush1.msra.mxu0 %v1831
    %1952 = vmatprep.subr.mxu0 %v1836
    %1953 = vmatpush1.msra.mxu0 %v1835
    %1954 = vmatprep.subr.mxu0 %v1840
    %1955 = vmatpush1.msra.mxu0 %v1839
    %1956 = vmatprep.subr.mxu0 %v1844
    %1957 = vmatpush1.msra.mxu0 %v1843
    %1958 = vmatprep.subr.mxu0 %v1848
    %1959 = vmatpush1.msra.mxu0 %v1847
    %1960 = vmatprep.subr.mxu0 %v1852
    %1961 = vmatpush1.msra.mxu0 %v1851
    %1962 = vmatprep.subr.mxu0 %v1856
    %1963 = vmatpush1.msra.mxu0 %v1855
    %1964 = vmatprep.subr.mxu0 %v1860
    %1965 = vmatpush1.msra.mxu0 %v1859
    %1966 = vmatprep.subr.mxu0 %v1864
    %1967 = vmatpush1.msra.mxu0 %v1863
    %1968 = vmatprep.subr.mxu0 0.0
    %1969 = vmatpush1.msra.mxu0 0.0
    %1970 = vmatprep.subr.mxu0 0.0
    %1971 = vmatpush1.msra.mxu0 0.0
    %1972 = vmatprep.subr.mxu0 0.0
    %1973 = vmatpush1.msra.mxu0 0.0
    %1974 = vmatprep.subr.mxu0 0.0
    %1975 = vmatpush1.msra.mxu0 0.0
    %1976 = vmatprep.subr.mxu0 0.0
    %1977 = vmatpush1.msra.mxu0 0.0
    %1978 = vmatprep.subr.mxu0 0.0
    %1979 = vmatpush1.msra.mxu0 0.0
    %1980 = vmatprep.subr.mxu0 0.0
    %1981 = vmatpush1.msra.mxu0 0.0
    %1982 = vmatprep.subr.mxu0 0.0
    %1983 = vmatpush1.msra.mxu0 0.0
    %1984 = vmatprep.subr.mxu0 0.0
    %1985 = vmatpush1.msra.mxu0 0.0
    %1986 = vmatprep.subr.mxu0 0.0
    %1987 = vmatpush1.msra.mxu0 0.0
    %1988 = vmatprep.subr.mxu0 0.0
    %1989 = vmatpush1.msra.mxu0 0.0
    %1990 = vmatprep.subr.mxu0 0.0
    %1991 = vmatpush1.msra.mxu0 0.0
    %1992 = vmatprep.subr.mxu0 0.0
    %1993 = vmatpush1.msra.mxu0 0.0
    %1994 = vmatprep.subr.mxu0 0.0
    %1995 = vmatpush1.msra.mxu0 0.0
    %1996 = vmatprep.subr.mxu0 0.0
    %1997 = vmatpush1.msra.mxu0 0.0
    %1998 = vmatprep.subr.mxu0 0.0
    %1999 = vmatpush1.msra.mxu0 0.0
    %2000 = vmatprep.mubr.f32.mxu0 0.0
    %2001 = vmatmul.mubr.f32.gmra.mrb[0].mxu0 %v1793
    %v2002 = vpop.f32.mrb[0].mxu0
    %v2003 = vadd.f32 0.0, %v2002
    %v2004 = vpop.f32.mrb[0].mxu0
    %v2005 = vadd.f32 0.0, %v2004
    %2006 = vdwg.mxu0
    %v2007 = vadd.f32 %v1797, %v1932
    %v2008 = vadd.f32 %v1798, %v1934
    %v2009 = vadd.f32 %v1799, %v2003
    %v2010 = vadd.f32 %v1800, %v2005
    %v2011 = vmul.f32 %v2007, 0.5
    %v2012 = vmul.f32 %v2008, 0.5
    %v2013 = vmul.f32 %v2009, 0.5
    %v2014 = vtanh.pop %v2011
    %v2015 = vtanh.pop %v2012
    %v2016 = vtanh.pop %v2013
    %v2017 = vmul.f32 %v2014, 0.5
    %v2018 = vmul.f32 %v2015, 0.5
    %v2019 = vmul.f32 %v2016, 0.5
    %v2020 = vadd.f32 %v2017, 0.5
    %v2021 = vadd.f32 %v2018, 0.5
    %v2022 = vadd.f32 %v2019, 0.5
    %v2023 = vtanh.pop %v2010
    %v2024 = vmul.f32 %v2021, %v1791
    %v2025 = vmul.f32 %v2020, %v2023
    %v2026 = vadd.f32 %v2024, %v2025
    %v2027 = vtanh.pop %v2026
    %v2028 = vmul.f32 %v2022, %v2027
    %s2029 = scalar_lea.vmem [#allocation11], 48
    %2030 = vst [vmem:[%s2029] sm:$0xff] %v2028
    %s2031 = scalar_lea.vmem [#allocation2], 224
    %v2032 = vld [vmem:[%s2031] sm:$0xff]
    %v2033 = vld [vmem:[%s2031 + $0x8] sm:$0xff]
    %v2034 = vld [vmem:[%s2031 + $0x10] sm:$0xff]
    %v2035 = vld [vmem:[%s2031 + $0x18] sm:$0xff]
    %v2036 = vld [vmem:[#allocation10] sm:$0xff]
    %v2037 = vld [vmem:[#allocation10 + $0x8] sm:$0xff]
    %v2038 = vld [vmem:[#allocation10 + $0x10] sm:$0xff]
    %v2039 = vld [vmem:[#allocation10 + $0x18] sm:$0xff]
    %v2040 = vld [vmem:[#allocation10 + $0x20] sm:$0xff]
    %v2041 = vld [vmem:[#allocation10 + $0x28] sm:$0xff]
    %v2042 = vld [vmem:[#allocation10 + $0x30] sm:$0xff]
    %v2043 = vld [vmem:[#allocation10 + $0x38] sm:$0xff]
    %v2044 = vld [vmem:[#allocation10 + $0x40] sm:$0xff]
    %v2045 = vld [vmem:[#allocation10 + $0x48] sm:$0xff]
    %v2046 = vld [vmem:[#allocation10 + $0x50] sm:$0xff]
    %v2047 = vld [vmem:[#allocation10 + $0x58] sm:$0xff]
    %v2048 = vld [vmem:[#allocation10 + $0x60] sm:$0xff]
    %v2049 = vld [vmem:[#allocation10 + $0x68] sm:$0xff]
    %v2050 = vld [vmem:[#allocation10 + $0x70] sm:$0xff]
    %v2051 = vld [vmem:[#allocation10 + $0x78] sm:$0xff]
    %v2052 = vld [vmem:[#allocation10 + $0x80] sm:$0xff]
    %v2053 = vld [vmem:[#allocation10 + $0x88] sm:$0xff]
    %v2054 = vld [vmem:[#allocation10 + $0x90] sm:$0xff]
    %v2055 = vld [vmem:[#allocation10 + $0x98] sm:$0xff]
    %v2056 = vld [vmem:[#allocation10 + $0xa0] sm:$0xff]
    %v2057 = vld [vmem:[#allocation10 + $0xa8] sm:$0xff]
    %v2058 = vld [vmem:[#allocation10 + $0xb0] sm:$0xff]
    %v2059 = vld [vmem:[#allocation10 + $0xb8] sm:$0xff]
    %v2060 = vld [vmem:[#allocation10 + $0xc0] sm:$0xff]
    %v2061 = vld [vmem:[#allocation10 + $0xc8] sm:$0xff]
    %v2062 = vld [vmem:[#allocation10 + $0xd0] sm:$0xff]
    %v2063 = vld [vmem:[#allocation10 + $0xd8] sm:$0xff]
    %v2064 = vld [vmem:[#allocation10 + $0xe0] sm:$0xff]
    %v2065 = vld [vmem:[#allocation10 + $0xe8] sm:$0xff]
    %v2066 = vld [vmem:[#allocation10 + $0xf0] sm:$0xff]
    %v2067 = vld [vmem:[#allocation10 + $0xf8] sm:$0xff]
    %v2068 = vld [vmem:[#allocation10 + $0x100] sm:$0xff]
    %v2069 = vld [vmem:[#allocation10 + $0x108] sm:$0xff]
    %v2070 = vld [vmem:[#allocation10 + $0x110] sm:$0xff]
    %v2071 = vld [vmem:[#allocation10 + $0x118] sm:$0xff]
    %v2072 = vld [vmem:[#allocation10 + $0x120] sm:$0xff]
    %v2073 = vld [vmem:[#allocation10 + $0x128] sm:$0xff]
    %v2074 = vld [vmem:[#allocation10 + $0x130] sm:$0xff]
    %v2075 = vld [vmem:[#allocation10 + $0x138] sm:$0xff]
    %v2076 = vld [vmem:[#allocation10 + $0x140] sm:$0xff]
    %v2077 = vld [vmem:[#allocation10 + $0x148] sm:$0xff]
    %v2078 = vld [vmem:[#allocation10 + $0x150] sm:$0xff]
    %v2079 = vld [vmem:[#allocation10 + $0x158] sm:$0xff]
    %v2080 = vld [vmem:[#allocation10 + $0x160] sm:$0xff]
    %v2081 = vld [vmem:[#allocation10 + $0x168] sm:$0xff]
    %v2082 = vld [vmem:[#allocation10 + $0x170] sm:$0xff]
    %v2083 = vld [vmem:[#allocation10 + $0x178] sm:$0xff]
    %v2084 = vld [vmem:[#allocation10 + $0x180] sm:$0xff]
    %v2085 = vld [vmem:[#allocation10 + $0x188] sm:$0xff]
    %v2086 = vld [vmem:[#allocation10 + $0x190] sm:$0xff]
    %v2087 = vld [vmem:[#allocation10 + $0x198] sm:$0xff]
    %v2088 = vld [vmem:[#allocation10 + $0x1a0] sm:$0xff]
    %v2089 = vld [vmem:[#allocation10 + $0x1a8] sm:$0xff]
    %v2090 = vld [vmem:[#allocation10 + $0x1b0] sm:$0xff]
    %v2091 = vld [vmem:[#allocation10 + $0x1b8] sm:$0xff]
    %v2092 = vld [vmem:[#allocation10 + $0x1c0] sm:$0xff]
    %v2093 = vld [vmem:[#allocation10 + $0x1c8] sm:$0xff]
    %v2094 = vld [vmem:[#allocation10 + $0x1d0] sm:$0xff]
    %v2095 = vld [vmem:[#allocation10 + $0x1d8] sm:$0xff]
    %v2096 = vld [vmem:[#allocation10 + $0x1e0] sm:$0xff]
    %v2097 = vld [vmem:[#allocation10 + $0x1e8] sm:$0xff]
    %v2098 = vld [vmem:[#allocation10 + $0x1f0] sm:$0xff]
    %v2099 = vld [vmem:[#allocation10 + $0x1f8] sm:$0xff]
    %2100 = vmatprep.subr.mxu0 %v2037
    %2101 = vmatpush1.msra.mxu0 %v2036
    %2102 = vmatprep.subr.mxu0 %v2041
    %2103 = vmatpush1.msra.mxu0 %v2040
    %2104 = vmatprep.subr.mxu0 %v2045
    %2105 = vmatpush1.msra.mxu0 %v2044
    %2106 = vmatprep.subr.mxu0 %v2049
    %2107 = vmatpush1.msra.mxu0 %v2048
    %2108 = vmatprep.subr.mxu0 %v2053
    %2109 = vmatpush1.msra.mxu0 %v2052
    %2110 = vmatprep.subr.mxu0 %v2057
    %2111 = vmatpush1.msra.mxu0 %v2056
    %2112 = vmatprep.subr.mxu0 %v2061
    %2113 = vmatpush1.msra.mxu0 %v2060
    %2114 = vmatprep.subr.mxu0 %v2065
    %2115 = vmatpush1.msra.mxu0 %v2064
    %2116 = vmatprep.subr.mxu0 %v2069
    %2117 = vmatpush1.msra.mxu0 %v2068
    %2118 = vmatprep.subr.mxu0 %v2073
    %2119 = vmatpush1.msra.mxu0 %v2072
    %2120 = vmatprep.subr.mxu0 %v2077
    %2121 = vmatpush1.msra.mxu0 %v2076
    %2122 = vmatprep.subr.mxu0 %v2081
    %2123 = vmatpush1.msra.mxu0 %v2080
    %2124 = vmatprep.subr.mxu0 %v2085
    %2125 = vmatpush1.msra.mxu0 %v2084
    %2126 = vmatprep.subr.mxu0 %v2089
    %2127 = vmatpush1.msra.mxu0 %v2088
    %2128 = vmatprep.subr.mxu0 %v2093
    %2129 = vmatpush1.msra.mxu0 %v2092
    %2130 = vmatprep.subr.mxu0 %v2097
    %2131 = vmatpush1.msra.mxu0 %v2096
    %2132 = vmatprep.subr.mxu0 0.0
    %2133 = vmatpush1.msra.mxu0 0.0
    %2134 = vmatprep.subr.mxu0 0.0
    %2135 = vmatpush1.msra.mxu0 0.0
    %2136 = vmatprep.subr.mxu0 0.0
    %2137 = vmatpush1.msra.mxu0 0.0
    %2138 = vmatprep.subr.mxu0 0.0
    %2139 = vmatpush1.msra.mxu0 0.0
    %2140 = vmatprep.subr.mxu0 0.0
    %2141 = vmatpush1.msra.mxu0 0.0
    %2142 = vmatprep.subr.mxu0 0.0
    %2143 = vmatpush1.msra.mxu0 0.0
    %2144 = vmatprep.subr.mxu0 0.0
    %2145 = vmatpush1.msra.mxu0 0.0
    %2146 = vmatprep.subr.mxu0 0.0
    %2147 = vmatpush1.msra.mxu0 0.0
    %2148 = vmatprep.subr.mxu0 0.0
    %2149 = vmatpush1.msra.mxu0 0.0
    %2150 = vmatprep.subr.mxu0 0.0
    %2151 = vmatpush1.msra.mxu0 0.0
    %2152 = vmatprep.subr.mxu0 0.0
    %2153 = vmatpush1.msra.mxu0 0.0
    %2154 = vmatprep.subr.mxu0 0.0
    %2155 = vmatpush1.msra.mxu0 0.0
    %2156 = vmatprep.subr.mxu0 0.0
    %2157 = vmatpush1.msra.mxu0 0.0
    %2158 = vmatprep.subr.mxu0 0.0
    %2159 = vmatpush1.msra.mxu0 0.0
    %2160 = vmatprep.subr.mxu0 0.0
    %2161 = vmatpush1.msra.mxu0 0.0
    %2162 = vmatprep.subr.mxu0 0.0
    %2163 = vmatpush1.msra.mxu0 0.0
    %2164 = vmatprep.mubr.f32.mxu0 0.0
    %2165 = vmatmul.mubr.f32.gmra.mrb[0].mxu0 %v2028
    %v2166 = vpop.f32.mrb[0].mxu0
    %v2167 = vadd.f32 0.0, %v2166
    %v2168 = vpop.f32.mrb[0].mxu0
    %v2169 = vadd.f32 0.0, %v2168
    %2170 = vdwg.mxu0
    %2171 = vmatprep.subr.mxu0 %v2039
    %2172 = vmatpush1.msra.mxu0 %v2038
    %2173 = vmatprep.subr.mxu0 %v2043
    %2174 = vmatpush1.msra.mxu0 %v2042
    %2175 = vmatprep.subr.mxu0 %v2047
    %2176 = vmatpush1.msra.mxu0 %v2046
    %2177 = vmatprep.subr.mxu0 %v2051
    %2178 = vmatpush1.msra.mxu0 %v2050
    %2179 = vmatprep.subr.mxu0 %v2055
    %2180 = vmatpush1.msra.mxu0 %v2054
    %2181 = vmatprep.subr.mxu0 %v2059
    %2182 = vmatpush1.msra.mxu0 %v2058
    %2183 = vmatprep.subr.mxu0 %v2063
    %2184 = vmatpush1.msra.mxu0 %v2062
    %2185 = vmatprep.subr.mxu0 %v2067
    %2186 = vmatpush1.msra.mxu0 %v2066
    %2187 = vmatprep.subr.mxu0 %v2071
    %2188 = vmatpush1.msra.mxu0 %v2070
    %2189 = vmatprep.subr.mxu0 %v2075
    %2190 = vmatpush1.msra.mxu0 %v2074
    %2191 = vmatprep.subr.mxu0 %v2079
    %2192 = vmatpush1.msra.mxu0 %v2078
    %2193 = vmatprep.subr.mxu0 %v2083
    %2194 = vmatpush1.msra.mxu0 %v2082
    %2195 = vmatprep.subr.mxu0 %v2087
    %2196 = vmatpush1.msra.mxu0 %v2086
    %2197 = vmatprep.subr.mxu0 %v2091
    %2198 = vmatpush1.msra.mxu0 %v2090
    %2199 = vmatprep.subr.mxu0 %v2095
    %2200 = vmatpush1.msra.mxu0 %v2094
    %2201 = vmatprep.subr.mxu0 %v2099
    %2202 = vmatpush1.msra.mxu0 %v2098
    %2203 = vmatprep.subr.mxu0 0.0
    %2204 = vmatpush1.msra.mxu0 0.0
    %2205 = vmatprep.subr.mxu0 0.0
    %2206 = vmatpush1.msra.mxu0 0.0
    %2207 = vmatprep.subr.mxu0 0.0
    %2208 = vmatpush1.msra.mxu0 0.0
    %2209 = vmatprep.subr.mxu0 0.0
    %2210 = vmatpush1.msra.mxu0 0.0
    %2211 = vmatprep.subr.mxu0 0.0
    %2212 = vmatpush1.msra.mxu0 0.0
    %2213 = vmatprep.subr.mxu0 0.0
    %2214 = vmatpush1.msra.mxu0 0.0
    %2215 = vmatprep.subr.mxu0 0.0
    %2216 = vmatpush1.msra.mxu0 0.0
    %2217 = vmatprep.subr.mxu0 0.0
    %2218 = vmatpush1.msra.mxu0 0.0
    %2219 = vmatprep.subr.mxu0 0.0
    %2220 = vmatpush1.msra.mxu0 0.0
    %2221 = vmatprep.subr.mxu0 0.0
    %2222 = vmatpush1.msra.mxu0 0.0
    %2223 = vmatprep.subr.mxu0 0.0
    %2224 = vmatpush1.msra.mxu0 0.0
    %2225 = vmatprep.subr.mxu0 0.0
    %2226 = vmatpush1.msra.mxu0 0.0
    %2227 = vmatprep.subr.mxu0 0.0
    %2228 = vmatpush1.msra.mxu0 0.0
    %2229 = vmatprep.subr.mxu0 0.0
    %2230 = vmatpush1.msra.mxu0 0.0
    %2231 = vmatprep.subr.mxu0 0.0
    %2232 = vmatpush1.msra.mxu0 0.0
    %2233 = vmatprep.subr.mxu0 0.0
    %2234 = vmatpush1.msra.mxu0 0.0
    %2235 = vmatprep.mubr.f32.mxu0 0.0
    %2236 = vmatmul.mubr.f32.gmra.mrb[0].mxu0 %v2028
    %v2237 = vpop.f32.mrb[0].mxu0
    %v2238 = vadd.f32 0.0, %v2237
    %v2239 = vpop.f32.mrb[0].mxu0
    %v2240 = vadd.f32 0.0, %v2239
    %2241 = vdwg.mxu0
    %v2242 = vadd.f32 %v2032, %v2167
    %v2243 = vadd.f32 %v2033, %v2169
    %v2244 = vadd.f32 %v2034, %v2238
    %v2245 = vadd.f32 %v2035, %v2240
    %v2246 = vmul.f32 %v2242, 0.5
    %v2247 = vmul.f32 %v2243, 0.5
    %v2248 = vmul.f32 %v2244, 0.5
    %v2249 = vtanh.pop %v2246
    %v2250 = vtanh.pop %v2247
    %v2251 = vtanh.pop %v2248
    %v2252 = vmul.f32 %v2249, 0.5
    %v2253 = vmul.f32 %v2250, 0.5
    %v2254 = vmul.f32 %v2251, 0.5
    %v2255 = vadd.f32 %v2252, 0.5
    %v2256 = vadd.f32 %v2253, 0.5
    %v2257 = vadd.f32 %v2254, 0.5
    %v2258 = vtanh.pop %v2245
    %v2259 = vmul.f32 %v2256, %v2026
    %v2260 = vmul.f32 %v2255, %v2258
    %v2261 = vadd.f32 %v2259, %v2260
    %v2262 = vtanh.pop %v2261
    %v2263 = vmul.f32 %v2257, %v2262
    %s2264 = scalar_lea.vmem [#allocation11], 56
    %2265 = vst [vmem:[%s2264] sm:$0xff] %v2263
    %2266 = vst [vmem:[#allocation3] sm:$0xff] %v2263
    %2267 = vst [vmem:[#allocation4] sm:$0xff] %v2261
    // Predicated region
    $region34: #{tpu_custom_call.1} parent=1 // pred_check
      _
    $region35: #{tpu_custom_call.1} parent=1 // pred_check_branch
      %2269 = sbr.rel (0) target = $region37
    $region36: #{tpu_custom_call.1} parent=1 // pred_region
      %s2271 = ssub.s32 1024, 1024
      %2272 = vsyncadd [#allocation7], %s2271
      %s2273 = sshll.u32 [#allocation11], 4
      %s2274 = int_to_ptr.vmem [resolvable:$true] %s2273
      %2279 = dma.vmem_to_hbm [thread:$0]  %s2274, 1024, %s4, [#allocation7], 128, 128, 8
    $region37: #{tpu_custom_call.1} parent=1 // pred_fallthru
      _
    // Predicated region
    $region38: #{tpu_custom_call.1} parent=1 // pred_check
      _
    $region39: #{tpu_custom_call.1} parent=1 // pred_check_branch
      %2281 = sbr.rel (0) target = $region41
    $region40: #{tpu_custom_call.1} parent=1 // pred_region
      %2282 = dma.done [#allocation7], 1024
    $region41: #{tpu_custom_call.1} parent=1 // pred_fallthru
      _
    %2283 = vsyncpa [#allocation6], 1
    %2284 = vsyncpa [#allocation9], 1
    %2285 = vsyncpa [#allocation7], 1

</llo_original>
